<compile_context>
chip_gen: v7x
topology: tpu7x:2x2x1
jax: 0.10.0
libtpu: 0.0.40
codegen_flags: <defaults>
</compile_context>

<pallas_src>
import jax
import jax.numpy as jnp
from jax.experimental import pallas as pl
from jax.experimental.pallas import tpu as pltpu

FEAT = 512  # fixed by the module: nn.Linear(512 * 3, 512)


def _round_up(n, m):
    return (n + m - 1) // m * m


def pick_kernel(x_ref, w0_ref, b0_ref, w1_ref, b1_ref, w2_ref, b2_ref, out_ref):
    # x_ref:  (3*TB, D)  bf16   -- clip i occupies rows [i*TB, (i+1)*TB)
    # w0_ref: (D, 512)   bf16   b0_ref: (1, 512)  f32    -- base_network (Linear)
    # w1_ref: (1536, 512) bf16  b1_ref: (1, 512)  f32    -- self.fc
    # w2_ref: (512, NP)  bf16   b2_ref: (1, NP)   f32    -- self.fc_classify
    # out_ref: (TB, NP)  f32
    TB = out_ref.shape[0]

    # One merged MXU push for all 3 clips: relu(base_network(clip)).
    f = jnp.dot(x_ref[...], w0_ref[...], preferred_element_type=jnp.float32)
    f = jnp.maximum(f + b0_ref[...], 0.0).astype(jnp.bfloat16)      # (3*TB, 512)

    # cat(f0, f1, f2) @ W1 == sum_i f_i @ W1[i*512:(i+1)*512]
    h = jnp.zeros((TB, FEAT), jnp.float32)
    for i in range(3):
        h = h + jnp.dot(f[i * TB:(i + 1) * TB, :],
                        w1_ref[i * FEAT:(i + 1) * FEAT, :],
                        preferred_element_type=jnp.float32)
    h = h + b1_ref[...]                                              # f12

    # TODO(synk): nn.Dropout(p=0.5) is identity here (eval-mode semantics).

    out = jnp.dot(h.astype(jnp.bfloat16), w2_ref[...],
                  preferred_element_type=jnp.float32) + b2_ref[...]
    out_ref[...] = out.astype(out_ref.dtype)


def pick_forward(x, w0, b0, w1, b1, w2, b2):
    """x: (B, nums, D) float32 -> (B, num_options) float32."""
    B, nums, D = x.shape
    assert nums >= 3, "Pick.forward uses f[0], f[1], f[2]"
    num_options = w2.shape[1]

    # Batch tile: multiple of 8 sublanes, up to 128.
    TB = 128 if B >= 128 else _round_up(B, 8)
    B_pad = _round_up(B, TB)
    n_tiles = B_pad // TB
    NP = _round_up(num_options, 128)          # lane-dense output store

    # Only the 3 used clips are read; cast to bf16 for the MXU. Layout the
    # slab tile-major -> clip -> row-within-tile so each grid step reads one
    # contiguous (3*TB, D) block whose per-clip slices are sublane-aligned.
    x3 = x[:, :3, :].astype(jnp.bfloat16)                             # (B, 3, D)
    x3 = jnp.pad(x3, ((0, B_pad - B), (0, 0), (0, 0)))                # (B_pad, 3, D)
    x_slab = (x3.reshape(n_tiles, TB, 3, D)
                .transpose(0, 2, 1, 3)
                .reshape(n_tiles * 3 * TB, D))                        # (n_tiles*3*TB, D)

    w0b = w0.astype(jnp.bfloat16)
    w1b = w1.astype(jnp.bfloat16)
    w2b = jnp.pad(w2, ((0, 0), (0, NP - num_options))).astype(jnp.bfloat16)
    b0f = b0.astype(jnp.float32)
    b1f = b1.astype(jnp.float32)
    b2f = jnp.pad(b2, ((0, 0), (0, NP - num_options))).astype(jnp.float32)

    flops = 2 * B_pad * (3 * D * FEAT + 3 * FEAT * FEAT + FEAT * NP)
    bytes_accessed = (x_slab.size * 2 + w0b.size * 2 + w1b.size * 2 +
                      w2b.size * 2 +
                      (b0f.size + b1f.size + b2f.size) * 4 +
                      B_pad * NP * 4)

    out = pl.pallas_call(
        pick_kernel,
        out_shape=jax.ShapeDtypeStruct((B_pad, NP), jnp.float32),
        grid=(n_tiles,),
        in_specs=[
            pl.BlockSpec((3 * TB, D), lambda b: (b, 0)),      # x slab (batch-tiled)
            pl.BlockSpec((D, FEAT), lambda b: (0, 0)),        # w0 (resident)
            pl.BlockSpec((1, FEAT), lambda b: (0, 0)),        # b0
            pl.BlockSpec((3 * FEAT, FEAT), lambda b: (0, 0)), # w1 (resident)
            pl.BlockSpec((1, FEAT), lambda b: (0, 0)),        # b1
            pl.BlockSpec((FEAT, NP), lambda b: (0, 0)),       # w2 (resident)
            pl.BlockSpec((1, NP), lambda b: (0, 0)),          # b2
        ],
        out_specs=pl.BlockSpec((TB, NP), lambda b: (b, 0)),
        compiler_params=pltpu.CompilerParams(
            dimension_semantics=("parallel",),
            vmem_limit_bytes=32 * 1024 * 1024),
        cost_estimate=pl.CostEstimate(
            flops=flops, transcendentals=0, bytes_accessed=bytes_accessed),
    )(x_slab, w0b, b0f, w1b, b1f, w2b, b2f)

    return out[:B, :num_options]


def pick_reference(x, w0, b0, w1, b1, w2, b2):
    """Pure-JAX f32 reference mirroring the PyTorch forward (eval mode)."""
    f = [jnp.maximum(x[:, i, :] @ w0 + b0[0], 0.0) for i in range(3)]
    f123 = jnp.concatenate(f, axis=1)
    f12 = f123 @ w1 + b1[0]
    return f12 @ w2 + b2[0]


if __name__ == "__main__":
    key = jax.random.PRNGKey(0)
    B, nums, D = 2, 4, 128          # nums > 3: extra clip is ignored (as in the module)
    num_options = 4

    k = jax.random.split(key, 7)
    x  = jax.random.normal(k[0], (B, nums, D), jnp.float32)
    w0 = jax.random.normal(k[1], (D, FEAT), jnp.float32) * 0.05
    b0 = jax.random.normal(k[2], (1, FEAT), jnp.float32) * 0.01
    w1 = jax.random.normal(k[3], (3 * FEAT, FEAT), jnp.float32) * 0.02
    b1 = jax.random.normal(k[4], (1, FEAT), jnp.float32) * 0.01
    w2 = jax.random.normal(k[5], (FEAT, num_options), jnp.float32) * 0.05
    b2 = jax.random.normal(k[6], (1, num_options), jnp.float32) * 0.01

    out = jax.block_until_ready(pick_forward(x, w0, b0, w1, b1, w2, b2))
    ref = pick_reference(x, w0, b0, w1, b1, w2, b2)

    assert out.shape == (B, num_options)
    # bf16 weights/activations with f32 accumulation -> loosened tolerance.
    assert jnp.allclose(out, ref, atol=5e-2, rtol=5e-2), "mismatch vs reference"

    print("KERNEL_OK")
</pallas_src>

<mosaic_0001>
module attributes {stable_mosaic.version = 11 : i64} {
  func.func @pick_kernel(%arg0: i32, %arg1: memref<24x128xbf16, #tpu.memory_space<vmem>>, %arg2: memref<128x512xbf16, #tpu.memory_space<vmem>>, %arg3: memref<1x512xf32, #tpu.memory_space<vmem>>, %arg4: memref<1536x512xbf16, #tpu.memory_space<vmem>>, %arg5: memref<1x512xf32, #tpu.memory_space<vmem>>, %arg6: memref<512x128xbf16, #tpu.memory_space<vmem>>, %arg7: memref<1x128xf32, #tpu.memory_space<vmem>>, %arg8: memref<8x128xf32, #tpu.memory_space<vmem>>) attributes {dimension_semantics = [#tpu.dimension_semantics<parallel>], iteration_bounds = array<i64: 1>, scalar_prefetch = 0 : i64, scratch_operands = 0 : i64, tpu.core_type = #tpu.core_type<tc>, window_params = [{transform_indices = @transform_0, window_bounds = array<i64: 24, 128>}, {pipeline_mode = #tpu.pipeline_mode<synchronous>, transform_indices = @transform_1, window_bounds = array<i64: 128, 512>}, {pipeline_mode = #tpu.pipeline_mode<synchronous>, transform_indices = @transform_2, window_bounds = array<i64: 1, 512>}, {pipeline_mode = #tpu.pipeline_mode<synchronous>, transform_indices = @transform_3, window_bounds = array<i64: 1536, 512>}, {pipeline_mode = #tpu.pipeline_mode<synchronous>, transform_indices = @transform_4, window_bounds = array<i64: 1, 512>}, {pipeline_mode = #tpu.pipeline_mode<synchronous>, transform_indices = @transform_5, window_bounds = array<i64: 512, 128>}, {pipeline_mode = #tpu.pipeline_mode<synchronous>, transform_indices = @transform_6, window_bounds = array<i64: 1, 128>}, {transform_indices = @transform_7, window_bounds = array<i64: 8, 128>}]} {
    %c0 = arith.constant 0 : index
    %c0_0 = arith.constant 0 : index
    %0 = vector.load %arg1[%c0, %c0_0] : memref<24x128xbf16, #tpu.memory_space<vmem>>, vector<24x128xbf16>
    %c0_1 = arith.constant 0 : index
    %c0_2 = arith.constant 0 : index
    %1 = vector.load %arg2[%c0_1, %c0_2] : memref<128x512xbf16, #tpu.memory_space<vmem>>, vector<128x512xbf16>
    %cst = arith.constant dense<0.000000e+00> : vector<24x512xf32>
    %2 = tpu.matmul %0, %1, %cst {dimension_numbers = #tpu.dot_dimension_numbers<[1], [0], [0], [1], [0, 0, 1, 1], [], []>} : vector<24x128xbf16>, vector<128x512xbf16>, vector<24x512xf32> -> vector<24x512xf32>
    %c0_3 = arith.constant 0 : index
    %c0_4 = arith.constant 0 : index
    %3 = vector.load %arg3[%c0_3, %c0_4] : memref<1x512xf32, #tpu.memory_space<vmem>>, vector<1x512xf32>
    %4 = vector.broadcast %3 : vector<1x512xf32> to vector<24x512xf32>
    %5 = arith.addf %2, %4 : vector<24x512xf32>
    %cst_5 = arith.constant 0.000000e+00 : f32
    %6 = vector.broadcast %cst_5 : f32 to vector<24x512xf32>
    %7 = arith.maximumf %5, %6 : vector<24x512xf32>
    %8 = arith.truncf %7 : vector<24x512xf32> to vector<24x512xbf16>
    %cst_6 = arith.constant 0.000000e+00 : f32
    %9 = vector.broadcast %cst_6 : f32 to vector<8x512xf32>
    %10 = vector.extract_strided_slice %8 {offsets = [0, 0], sizes = [8, 512], strides = [1, 1]} : vector<24x512xbf16> to vector<8x512xbf16>
    %c0_7 = arith.constant 0 : index
    %c0_8 = arith.constant 0 : index
    %11 = vector.load %arg4[%c0_7, %c0_8] : memref<1536x512xbf16, #tpu.memory_space<vmem>>, vector<512x512xbf16>
    %cst_9 = arith.constant dense<0.000000e+00> : vector<8x512xf32>
    %12 = tpu.matmul %10, %11, %cst_9 {dimension_numbers = #tpu.dot_dimension_numbers<[1], [0], [0], [1], [0, 0, 1, 1], [], []>} : vector<8x512xbf16>, vector<512x512xbf16>, vector<8x512xf32> -> vector<8x512xf32>
    %13 = arith.addf %9, %12 : vector<8x512xf32>
    %14 = vector.extract_strided_slice %8 {offsets = [8, 0], sizes = [8, 512], strides = [1, 1]} : vector<24x512xbf16> to vector<8x512xbf16>
    %c512 = arith.constant 512 : index
    %c0_10 = arith.constant 0 : index
    %15 = vector.load %arg4[%c512, %c0_10] : memref<1536x512xbf16, #tpu.memory_space<vmem>>, vector<512x512xbf16>
    %cst_11 = arith.constant dense<0.000000e+00> : vector<8x512xf32>
    %16 = tpu.matmul %14, %15, %cst_11 {dimension_numbers = #tpu.dot_dimension_numbers<[1], [0], [0], [1], [0, 0, 1, 1], [], []>} : vector<8x512xbf16>, vector<512x512xbf16>, vector<8x512xf32> -> vector<8x512xf32>
    %17 = arith.addf %13, %16 : vector<8x512xf32>
    %18 = vector.extract_strided_slice %8 {offsets = [16, 0], sizes = [8, 512], strides = [1, 1]} : vector<24x512xbf16> to vector<8x512xbf16>
    %c1024 = arith.constant 1024 : index
    %c0_12 = arith.constant 0 : index
    %19 = vector.load %arg4[%c1024, %c0_12] : memref<1536x512xbf16, #tpu.memory_space<vmem>>, vector<512x512xbf16>
    %cst_13 = arith.constant dense<0.000000e+00> : vector<8x512xf32>
    %20 = tpu.matmul %18, %19, %cst_13 {dimension_numbers = #tpu.dot_dimension_numbers<[1], [0], [0], [1], [0, 0, 1, 1], [], []>} : vector<8x512xbf16>, vector<512x512xbf16>, vector<8x512xf32> -> vector<8x512xf32>
    %21 = arith.addf %17, %20 : vector<8x512xf32>
    %c0_14 = arith.constant 0 : index
    %c0_15 = arith.constant 0 : index
    %22 = vector.load %arg5[%c0_14, %c0_15] : memref<1x512xf32, #tpu.memory_space<vmem>>, vector<1x512xf32>
    %23 = vector.broadcast %22 : vector<1x512xf32> to vector<8x512xf32>
    %24 = arith.addf %21, %23 : vector<8x512xf32>
    %25 = arith.truncf %24 : vector<8x512xf32> to vector<8x512xbf16>
    %c0_16 = arith.constant 0 : index
    %c0_17 = arith.constant 0 : index
    %26 = vector.load %arg6[%c0_16, %c0_17] : memref<512x128xbf16, #tpu.memory_space<vmem>>, vector<512x128xbf16>
    %cst_18 = arith.constant dense<0.000000e+00> : vector<8x128xf32>
    %27 = tpu.matmul %25, %26, %cst_18 {dimension_numbers = #tpu.dot_dimension_numbers<[1], [0], [0], [1], [0, 0, 1, 1], [], []>} : vector<8x512xbf16>, vector<512x128xbf16>, vector<8x128xf32> -> vector<8x128xf32>
    %c0_19 = arith.constant 0 : index
    %c0_20 = arith.constant 0 : index
    %28 = vector.load %arg7[%c0_19, %c0_20] : memref<1x128xf32, #tpu.memory_space<vmem>>, vector<1x128xf32>
    %29 = vector.broadcast %28 : vector<1x128xf32> to vector<8x128xf32>
    %30 = arith.addf %27, %29 : vector<8x128xf32>
    %c0_21 = arith.constant 0 : index
    %c0_22 = arith.constant 0 : index
    %31 = vector.load %arg8[%c0_21, %c0_22] : memref<8x128xf32, #tpu.memory_space<vmem>>, vector<8x128xf32>
    tpu.vector_store %arg8[%c0_21, %c0_22], %30 {strides = array<i32>} : memref<8x128xf32, #tpu.memory_space<vmem>>, vector<8x128xf32>,
    return
  }
  func.func @transform_0(%arg0: i32) -> (i32, i32) {
    %c0_i32 = arith.constant 0 : i32
    %c0_i32_0 = arith.constant 0 : i32
    return %arg0, %c0_i32 : i32, i32
  }
  func.func @transform_1(%arg0: i32) -> (i32, i32) {
    %c0_i32 = arith.constant 0 : i32
    %c0_i32_0 = arith.constant 0 : i32
    %c0_i32_1 = arith.constant 0 : i32
    return %c0_i32, %c0_i32_0 : i32, i32
  }
  func.func @transform_2(%arg0: i32) -> (i32, i32) {
    %c0_i32 = arith.constant 0 : i32
    %c0_i32_0 = arith.constant 0 : i32
    %c0_i32_1 = arith.constant 0 : i32
    return %c0_i32, %c0_i32_0 : i32, i32
  }
  func.func @transform_3(%arg0: i32) -> (i32, i32) {
    %c0_i32 = arith.constant 0 : i32
    %c0_i32_0 = arith.constant 0 : i32
    %c0_i32_1 = arith.constant 0 : i32
    return %c0_i32, %c0_i32_0 : i32, i32
  }
  func.func @transform_4(%arg0: i32) -> (i32, i32) {
    %c0_i32 = arith.constant 0 : i32
    %c0_i32_0 = arith.constant 0 : i32
    %c0_i32_1 = arith.constant 0 : i32
    return %c0_i32, %c0_i32_0 : i32, i32
  }
  func.func @transform_5(%arg0: i32) -> (i32, i32) {
    %c0_i32 = arith.constant 0 : i32
    %c0_i32_0 = arith.constant 0 : i32
    %c0_i32_1 = arith.constant 0 : i32
    return %c0_i32, %c0_i32_0 : i32, i32
  }
  func.func @transform_6(%arg0: i32) -> (i32, i32) {
    %c0_i32 = arith.constant 0 : i32
    %c0_i32_0 = arith.constant 0 : i32
    %c0_i32_1 = arith.constant 0 : i32
    return %c0_i32, %c0_i32_0 : i32, i32
  }
  func.func @transform_7(%arg0: i32) -> (i32, i32) {
    %c0_i32 = arith.constant 0 : i32
    %c0_i32_0 = arith.constant 0 : i32
    return %arg0, %c0_i32 : i32, i32
  }
}

</mosaic_0001>

<llo_original>
// kernel: tpu_custom_call.1
$region0: #{tpu_custom_call.1}
  #allocation0 [shape = 'u32[]', space=smem, size = 0x4, offset = 0x4, fixed_abs, tag = 'smem constant byte address 0x4 - core index']
  #allocation1 [shape = 'u32[144,128]{1,0:T(1,128)}', space=vmem, size = 0x12000, scoped, tag = 'internal scratch']
  %s0 = inlined_call_operand.hbm [shape: bf16[24,128], index: 0, kind: input, shape index: {}]
  %s1 = inlined_call_operand.hbm [shape: bf16[128,512], index: 1, kind: input, shape index: {}]
  %s2 = inlined_call_operand.hbm [shape: f32[1,512], index: 2, kind: input, shape index: {}]
  %s3 = inlined_call_operand.hbm [shape: bf16[1536,512], index: 3, kind: input, shape index: {}]
  %s4 = inlined_call_operand.hbm [shape: f32[1,512], index: 4, kind: input, shape index: {}]
  %s5 = inlined_call_operand.hbm [shape: bf16[512,128], index: 5, kind: input, shape index: {}]
  %s6 = inlined_call_operand.hbm [shape: f32[1,128], index: 6, kind: input, shape index: {}]
  %s7 = inlined_call_operand.hbm [shape: f32[8,128], index: 7, kind: output, shape index: {}]
  %s8 = sld [smem:[#allocation0]]
  $region66: #{tpu_custom_call.1} parent=0
    _
  %s10 = ssub.s32 1, %s8
  %s11 = scalar_select 0, %s10, %s8
  $region1: #{tpu_custom_call.1} parent=0
    #allocation2 [shape = 'u8[6144]{0}', space=vmem, size = 0x1800, scoped, tag = 'input window, operand 0, single buffered']
    #allocation3 [shape = 's32[1]{0}', space=sflag, size = 0x4, scoped, tag = 'scoped memory for tpu_custom_call.1']
    #allocation4 [shape = 's32[1]{0}', space=sflag, size = 0x4, scoped, tag = 'scoped memory for tpu_custom_call.1']
    #allocation5 [shape = 'u8[131072]{0}', space=vmem, size = 0x20000, scoped, tag = 'input window, operand 1, single buffered']
    #allocation6 [shape = 's32[1]{0}', space=sflag, size = 0x4, scoped, tag = 'scoped memory for tpu_custom_call.1']
    #allocation7 [shape = 'u8[2048]{0}', space=vmem, size = 0x800, scoped, tag = 'input window, operand 2, single buffered']
    #allocation8 [shape = 'u8[1572864]{0}', space=vmem, size = 0x180000, scoped, tag = 'input window, operand 3, single buffered']
    #allocation9 [shape = 's32[1]{0}', space=sflag, size = 0x4, scoped, tag = 'scoped memory for tpu_custom_call.1']
    #allocation10 [shape = 'u8[2048]{0}', space=vmem, size = 0x800, scoped, tag = 'input window, operand 4, single buffered']
    #allocation11 [shape = 'u8[131072]{0}', space=vmem, size = 0x20000, scoped, tag = 'input window, operand 5, single buffered']
    #allocation12 [shape = 's32[1]{0}', space=sflag, size = 0x4, scoped, tag = 'scoped memory for tpu_custom_call.1']
    #allocation13 [shape = 'u8[512]{0}', space=vmem, size = 0x400, scoped, tag = 'input window, operand 6, single buffered']
    #allocation14 [shape = 'u8[4096]{0}', space=vmem, size = 0x1000, scoped, tag = 'output window, operand 0, single buffered']
    %12 = vsyncpa [#allocation3], 0
    %13 = vsyncpa [#allocation6], 0
    %14 = vsyncpa [#allocation9], 0
    %15 = vsyncpa [#allocation12], 0
    %16 = vsyncpa [#allocation4], 0
    // Predicated region
    $region2: #{tpu_custom_call.1} parent=1 // pred_check
      _
    $region3: #{tpu_custom_call.1} parent=1 // pred_check_branch
      %18 = sbr.rel (0) target = $region5
    $region4: #{tpu_custom_call.1} parent=1 // pred_region
      %s20 = ssub.s32 192, 192
      %21 = vsyncadd [#allocation3], %s20
      %s22 = sshll.u32 [#allocation2], 4
      %s23 = int_to_ptr.vmem [resolvable:$true] %s22
      %28 = dma.hbm_to_vmem [thread:$0]  %s0, 192, %s23, [#allocation3], 64, 64, 4
    $region5: #{tpu_custom_call.1} parent=1 // pred_fallthru
      _
    // Predicated region
    $region6: #{tpu_custom_call.1} parent=1 // pred_check
      _
    $region7: #{tpu_custom_call.1} parent=1 // pred_check_branch
      %30 = sbr.rel (0) target = $region9
    $region8: #{tpu_custom_call.1} parent=1 // pred_region
      %s32 = ssub.s32 4096, 4096
      %33 = vsyncadd [#allocation6], %s32
      %s34 = sshll.u32 [#allocation5], 4
      %s35 = int_to_ptr.vmem [resolvable:$true] %s34
      %40 = dma.hbm_to_vmem [thread:$0]  %s1, 4096, %s35, [#allocation6], 256, 256, 16
    $region9: #{tpu_custom_call.1} parent=1 // pred_fallthru
      _
    // Predicated region
    $region10: #{tpu_custom_call.1} parent=1 // pred_check
      _
    $region11: #{tpu_custom_call.1} parent=1 // pred_check_branch
      %42 = sbr.rel (0) target = $region13
    $region12: #{tpu_custom_call.1} parent=1 // pred_region
      %s44 = ssub.s32 64, 64
      %45 = vsyncadd [#allocation6], %s44
      %s47 = sshll.u32 [#allocation7], 4
      %s48 = int_to_ptr.vmem [resolvable:$true] %s47
      %50 = dma.hbm_to_vmem [thread:$0]  %s2, 64, %s48, [#allocation6]
    $region13: #{tpu_custom_call.1} parent=1 // pred_fallthru
      _
    // Predicated region
    $region14: #{tpu_custom_call.1} parent=1 // pred_check
      _
    $region15: #{tpu_custom_call.1} parent=1 // pred_check_branch
      %52 = sbr.rel (0) target = $region17
    $region16: #{tpu_custom_call.1} parent=1 // pred_region
      %s54 = ssub.s32 49152, 49152
      %55 = vsyncadd [#allocation9], %s54
      %s56 = sshll.u32 [#allocation8], 4
      %s57 = int_to_ptr.vmem [resolvable:$true] %s56
      %62 = dma.hbm_to_vmem [thread:$0]  %s3, 49152, %s57, [#allocation9], 256, 256, 16
    $region17: #{tpu_custom_call.1} parent=1 // pred_fallthru
      _
    // Predicated region
    $region18: #{tpu_custom_call.1} parent=1 // pred_check
      _
    $region19: #{tpu_custom_call.1} parent=1 // pred_check_branch
      %64 = sbr.rel (0) target = $region21
    $region20: #{tpu_custom_call.1} parent=1 // pred_region
      %s66 = ssub.s32 64, 64
      %67 = vsyncadd [#allocation9], %s66
      %s69 = sshll.u32 [#allocation10], 4
      %s70 = int_to_ptr.vmem [resolvable:$true] %s69
      %72 = dma.hbm_to_vmem [thread:$0]  %s4, 64, %s70, [#allocation9]
    $region21: #{tpu_custom_call.1} parent=1 // pred_fallthru
      _
    // Predicated region
    $region22: #{tpu_custom_call.1} parent=1 // pred_check
      _
    $region23: #{tpu_custom_call.1} parent=1 // pred_check_branch
      %74 = sbr.rel (0) target = $region25
    $region24: #{tpu_custom_call.1} parent=1 // pred_region
      %s76 = ssub.s32 4096, 4096
      %77 = vsyncadd [#allocation12], %s76
      %s78 = sshll.u32 [#allocation11], 4
      %s79 = int_to_ptr.vmem [resolvable:$true] %s78
      %84 = dma.hbm_to_vmem [thread:$0]  %s5, 4096, %s79, [#allocation12], 64, 64, 4
    $region25: #{tpu_custom_call.1} parent=1 // pred_fallthru
      _
    // Predicated region
    $region26: #{tpu_custom_call.1} parent=1 // pred_check
      _
    $region27: #{tpu_custom_call.1} parent=1 // pred_check_branch
      %86 = sbr.rel (0) target = $region29
    $region28: #{tpu_custom_call.1} parent=1 // pred_region
      %s88 = ssub.s32 16, 16
      %89 = vsyncadd [#allocation12], %s88
      %s91 = sshll.u32 [#allocation13], 4
      %s92 = int_to_ptr.vmem [resolvable:$true] %s91
      %94 = dma.hbm_to_vmem [thread:$0]  %s6, 16, %s92, [#allocation12]
    $region29: #{tpu_custom_call.1} parent=1 // pred_fallthru
      _
    // Predicated region
    $region30: #{tpu_custom_call.1} parent=1 // pred_check
      _
    $region31: #{tpu_custom_call.1} parent=1 // pred_check_branch
      %96 = sbr.rel (0) target = $region33
    $region32: #{tpu_custom_call.1} parent=1 // pred_region
      %97 = dma.done [#allocation3], 192
    $region33: #{tpu_custom_call.1} parent=1 // pred_fallthru
      _
    // Predicated region
    $region34: #{tpu_custom_call.1} parent=1 // pred_check
      _
    $region35: #{tpu_custom_call.1} parent=1 // pred_check_branch
      %99 = sbr.rel (0) target = $region37
    $region36: #{tpu_custom_call.1} parent=1 // pred_region
      %100 = dma.done [#allocation6], 4096
    $region37: #{tpu_custom_call.1} parent=1 // pred_fallthru
      _
    // Predicated region
    $region38: #{tpu_custom_call.1} parent=1 // pred_check
      _
    $region39: #{tpu_custom_call.1} parent=1 // pred_check_branch
      %102 = sbr.rel (0) target = $region41
    $region40: #{tpu_custom_call.1} parent=1 // pred_region
      %103 = dma.done [#allocation6], 64
    $region41: #{tpu_custom_call.1} parent=1 // pred_fallthru
      _
    // Predicated region
    $region42: #{tpu_custom_call.1} parent=1 // pred_check
      _
    $region43: #{tpu_custom_call.1} parent=1 // pred_check_branch
      %105 = sbr.rel (0) target = $region45
    $region44: #{tpu_custom_call.1} parent=1 // pred_region
      %106 = dma.done [#allocation9], 49152
    $region45: #{tpu_custom_call.1} parent=1 // pred_fallthru
      _
    // Predicated region
    $region46: #{tpu_custom_call.1} parent=1 // pred_check
      _
    $region47: #{tpu_custom_call.1} parent=1 // pred_check_branch
      %108 = sbr.rel (0) target = $region49
    $region48: #{tpu_custom_call.1} parent=1 // pred_region
      %109 = dma.done [#allocation9], 64
    $region49: #{tpu_custom_call.1} parent=1 // pred_fallthru
      _
    // Predicated region
    $region50: #{tpu_custom_call.1} parent=1 // pred_check
      _
    $region51: #{tpu_custom_call.1} parent=1 // pred_check_branch
      %111 = sbr.rel (0) target = $region53
    $region52: #{tpu_custom_call.1} parent=1 // pred_region
      %112 = dma.done [#allocation12], 4096
    $region53: #{tpu_custom_call.1} parent=1 // pred_fallthru
      _
    // Predicated region
    $region54: #{tpu_custom_call.1} parent=1 // pred_check
      _
    $region55: #{tpu_custom_call.1} parent=1 // pred_check_branch
      %114 = sbr.rel (0) target = $region57
    $region56: #{tpu_custom_call.1} parent=1 // pred_region
      %115 = dma.done [#allocation12], 16
    $region57: #{tpu_custom_call.1} parent=1 // pred_fallthru
      _
    %v117 = vld [vmem:[#allocation2] sm:$0xf]
    %v118 = vld [vmem:[#allocation2 + $0x4] sm:$0xf]
    %v119 = vld [vmem:[#allocation2 + $0x8] sm:$0xf]
    %v120 = vld [vmem:[#allocation5] sm:$0xff]
    %v121 = vld [vmem:[#allocation5 + $0x8] sm:$0xff]
    %v122 = vld [vmem:[#allocation5 + $0x10] sm:$0xff]
    %v123 = vld [vmem:[#allocation5 + $0x18] sm:$0xff]
    %v124 = vld [vmem:[#allocation5 + $0x20] sm:$0xff]
    %v125 = vld [vmem:[#allocation5 + $0x28] sm:$0xff]
    %v126 = vld [vmem:[#allocation5 + $0x30] sm:$0xff]
    %v127 = vld [vmem:[#allocation5 + $0x38] sm:$0xff]
    %v128 = vld [vmem:[#allocation5 + $0x40] sm:$0xff]
    %v129 = vld [vmem:[#allocation5 + $0x48] sm:$0xff]
    %v130 = vld [vmem:[#allocation5 + $0x50] sm:$0xff]
    %v131 = vld [vmem:[#allocation5 + $0x58] sm:$0xff]
    %v132 = vld [vmem:[#allocation5 + $0x60] sm:$0xff]
    %v133 = vld [vmem:[#allocation5 + $0x68] sm:$0xff]
    %v134 = vld [vmem:[#allocation5 + $0x70] sm:$0xff]
    %v135 = vld [vmem:[#allocation5 + $0x78] sm:$0xff]
    %v136 = vld [vmem:[#allocation5 + $0x80] sm:$0xff]
    %v137 = vld [vmem:[#allocation5 + $0x88] sm:$0xff]
    %v138 = vld [vmem:[#allocation5 + $0x90] sm:$0xff]
    %v139 = vld [vmem:[#allocation5 + $0x98] sm:$0xff]
    %v140 = vld [vmem:[#allocation5 + $0xa0] sm:$0xff]
    %v141 = vld [vmem:[#allocation5 + $0xa8] sm:$0xff]
    %v142 = vld [vmem:[#allocation5 + $0xb0] sm:$0xff]
    %v143 = vld [vmem:[#allocation5 + $0xb8] sm:$0xff]
    %v144 = vld [vmem:[#allocation5 + $0xc0] sm:$0xff]
    %v145 = vld [vmem:[#allocation5 + $0xc8] sm:$0xff]
    %v146 = vld [vmem:[#allocation5 + $0xd0] sm:$0xff]
    %v147 = vld [vmem:[#allocation5 + $0xd8] sm:$0xff]
    %v148 = vld [vmem:[#allocation5 + $0xe0] sm:$0xff]
    %v149 = vld [vmem:[#allocation5 + $0xe8] sm:$0xff]
    %v150 = vld [vmem:[#allocation5 + $0xf0] sm:$0xff]
    %v151 = vld [vmem:[#allocation5 + $0xf8] sm:$0xff]
    %v152 = vld [vmem:[#allocation7] sm:$0xf]
    %v154 = vlaneseq
    %v155 = vshrl.u32 %v154, 7
    %v156 = vsub.s32 0, %v155
    %v157 = vrot.slane %v152, %v156
    %v158 = vlaneseq
    %v159 = vshrl.u32 %v158, 7
    %v160 = vsub.s32 1, %v159
    %v161 = vrot.slane %v152, %v160
    %v162 = vlaneseq
    %v163 = vshrl.u32 %v162, 7
    %v164 = vsub.s32 2, %v163
    %v165 = vrot.slane %v152, %v164
    %v166 = vlaneseq
    %v167 = vshrl.u32 %v166, 7
    %v168 = vsub.s32 3, %v167
    %v169 = vrot.slane %v152, %v168
    %v177 = vunpack.c.l.b16 %v117
    %v178 = vunpack.c.l.b16 %v118
    %v179 = vunpack.c.l.b16 %v119
    %v180 = vpack.c.b16 %v178, %v177
    %v181 = vpack.c.b16 %v179, %v179
    %v216 = vunpack.c.l.b16 %v120
    %v217 = vunpack.c.h.b16 %v120
    %v218 = vunpack.c.l.b16 %v121
    %v219 = vunpack.c.h.b16 %v121
    %v220 = vunpack.c.l.b16 %v122
    %v221 = vunpack.c.h.b16 %v122
    %v222 = vunpack.c.l.b16 %v123
    %v223 = vunpack.c.h.b16 %v123
    %v224 = vunpack.c.l.b16 %v124
    %v225 = vunpack.c.h.b16 %v124
    %v226 = vunpack.c.l.b16 %v125
    %v227 = vunpack.c.h.b16 %v125
    %v228 = vunpack.c.l.b16 %v126
    %v229 = vunpack.c.h.b16 %v126
    %v230 = vunpack.c.l.b16 %v127
    %v231 = vunpack.c.h.b16 %v127
    %v232 = vunpack.c.l.b16 %v128
    %v233 = vunpack.c.h.b16 %v128
    %v234 = vunpack.c.l.b16 %v129
    %v235 = vunpack.c.h.b16 %v129
    %v236 = vunpack.c.l.b16 %v130
    %v237 = vunpack.c.h.b16 %v130
    %v238 = vunpack.c.l.b16 %v131
    %v239 = vunpack.c.h.b16 %v131
    %v240 = vunpack.c.l.b16 %v132
    %v241 = vunpack.c.h.b16 %v132
    %v242 = vunpack.c.l.b16 %v133
    %v243 = vunpack.c.h.b16 %v133
    %v244 = vunpack.c.l.b16 %v134
    %v245 = vunpack.c.h.b16 %v134
    %v246 = vunpack.c.l.b16 %v135
    %v247 = vunpack.c.h.b16 %v135
    %v248 = vunpack.c.l.b16 %v136
    %v249 = vunpack.c.h.b16 %v136
    %v250 = vunpack.c.l.b16 %v137
    %v251 = vunpack.c.h.b16 %v137
    %v252 = vunpack.c.l.b16 %v138
    %v253 = vunpack.c.h.b16 %v138
    %v254 = vunpack.c.l.b16 %v139
    %v255 = vunpack.c.h.b16 %v139
    %v256 = vunpack.c.l.b16 %v140
    %v257 = vunpack.c.h.b16 %v140
    %v258 = vunpack.c.l.b16 %v141
    %v259 = vunpack.c.h.b16 %v141
    %v260 = vunpack.c.l.b16 %v142
    %v261 = vunpack.c.h.b16 %v142
    %v262 = vunpack.c.l.b16 %v143
    %v263 = vunpack.c.h.b16 %v143
    %v264 = vunpack.c.l.b16 %v144
    %v265 = vunpack.c.h.b16 %v144
    %v266 = vunpack.c.l.b16 %v145
    %v267 = vunpack.c.h.b16 %v145
    %v268 = vunpack.c.l.b16 %v146
    %v269 = vunpack.c.h.b16 %v146
    %v270 = vunpack.c.l.b16 %v147
    %v271 = vunpack.c.h.b16 %v147
    %v272 = vunpack.c.l.b16 %v148
    %v273 = vunpack.c.h.b16 %v148
    %v274 = vunpack.c.l.b16 %v149
    %v275 = vunpack.c.h.b16 %v149
    %v276 = vunpack.c.l.b16 %v150
    %v277 = vunpack.c.h.b16 %v150
    %v278 = vunpack.c.l.b16 %v151
    %v279 = vunpack.c.h.b16 %v151
    %v280 = vpack.c.b16 %v220, %v216
    %v281 = vpack.c.b16 %v221, %v217
    %v282 = vpack.c.b16 %v222, %v218
    %v283 = vpack.c.b16 %v223, %v219
    %v284 = vpack.c.b16 %v228, %v224
    %v285 = vpack.c.b16 %v229, %v225
    %v286 = vpack.c.b16 %v230, %v226
    %v287 = vpack.c.b16 %v231, %v227
    %v288 = vpack.c.b16 %v236, %v232
    %v289 = vpack.c.b16 %v237, %v233
    %v290 = vpack.c.b16 %v238, %v234
    %v291 = vpack.c.b16 %v239, %v235
    %v292 = vpack.c.b16 %v244, %v240
    %v293 = vpack.c.b16 %v245, %v241
    %v294 = vpack.c.b16 %v246, %v242
    %v295 = vpack.c.b16 %v247, %v243
    %v296 = vpack.c.b16 %v252, %v248
    %v297 = vpack.c.b16 %v253, %v249
    %v298 = vpack.c.b16 %v254, %v250
    %v299 = vpack.c.b16 %v255, %v251
    %v300 = vpack.c.b16 %v260, %v256
    %v301 = vpack.c.b16 %v261, %v257
    %v302 = vpack.c.b16 %v262, %v258
    %v303 = vpack.c.b16 %v263, %v259
    %v304 = vpack.c.b16 %v268, %v264
    %v305 = vpack.c.b16 %v269, %v265
    %v306 = vpack.c.b16 %v270, %v266
    %v307 = vpack.c.b16 %v271, %v267
    %v308 = vpack.c.b16 %v276, %v272
    %v309 = vpack.c.b16 %v277, %v273
    %v310 = vpack.c.b16 %v278, %v274
    %v311 = vpack.c.b16 %v279, %v275
    %344 = vmatprep.subr.bf16.mxu0 %v281
    %345 = vmatpush1.bf16.msra.mxu0 %v280
    %346 = vmatprep.subr.bf16.mxu0 %v285
    %347 = vmatpush1.bf16.msra.mxu0 %v284
    %348 = vmatprep.subr.bf16.mxu0 %v289
    %349 = vmatpush1.bf16.msra.mxu0 %v288
    %350 = vmatprep.subr.bf16.mxu0 %v293
    %351 = vmatpush1.bf16.msra.mxu0 %v292
    %352 = vmatprep.subr.bf16.mxu0 %v297
    %353 = vmatpush1.bf16.msra.mxu0 %v296
    %354 = vmatprep.subr.bf16.mxu0 %v301
    %355 = vmatpush1.bf16.msra.mxu0 %v300
    %356 = vmatprep.subr.bf16.mxu0 %v305
    %357 = vmatpush1.bf16.msra.mxu0 %v304
    %358 = vmatprep.subr.bf16.mxu0 %v309
    %359 = vmatpush1.bf16.msra.mxu0 %v308
    %360 = vmatprep.subr.bf16.mxu0 0
    %361 = vmatpush1.bf16.msra.mxu0 0
    %362 = vmatprep.subr.bf16.mxu0 0
    %363 = vmatpush1.bf16.msra.mxu0 0
    %364 = vmatprep.subr.bf16.mxu0 0
    %365 = vmatpush1.bf16.msra.mxu0 0
    %366 = vmatprep.subr.bf16.mxu0 0
    %367 = vmatpush1.bf16.msra.mxu0 0
    %368 = vmatprep.subr.bf16.mxu0 0
    %369 = vmatpush1.bf16.msra.mxu0 0
    %370 = vmatprep.subr.bf16.mxu0 0
    %371 = vmatpush1.bf16.msra.mxu0 0
    %372 = vmatprep.subr.bf16.mxu0 0
    %373 = vmatpush1.bf16.msra.mxu0 0
    %374 = vmatprep.subr.bf16.mxu0 0
    %375 = vmatpush1.bf16.msra.mxu0 0
    %376 = vmatprep.mubr.bf16.mxu0 0
    %377 = vmatmul.mubr.bf16.gmra.mrb[0].mxu0 %v180
    %v378 = vpop.f32.mrb[0].mxu0
    %v379 = vadd.f32 %v157, %v378
    %v380 = vpop.f32.mrb[0].mxu0
    %v381 = vadd.f32 %v161, %v380
    %v382 = vpop.f32.mrb[0].mxu0
    %v383 = vadd.f32 %v157, %v382
    %v384 = vpop.f32.mrb[0].mxu0
    %v385 = vadd.f32 %v161, %v384
    %386 = vmatprep.mubr.bf16.mxu0 0
    %387 = vmatmul.mubr.bf16.gmra.mrb[0].mxu0 %v181
    %v388 = vpop.f32.mrb[0].mxu0
    %v389 = vadd.f32 %v157, %v388
    %v390 = vpop.f32.mrb[0].mxu0
    %v391 = vadd.f32 %v161, %v390
    %v392 = vpop.f32.mrb[0].mxu0
    %v393 = vpop.f32.mrb[0].mxu0
    %394 = vdwg.mxu0
    %395 = vmatprep.subr.bf16.mxu0 %v283
    %396 = vmatpush1.bf16.msra.mxu0 %v282
    %397 = vmatprep.subr.bf16.mxu0 %v287
    %398 = vmatpush1.bf16.msra.mxu0 %v286
    %399 = vmatprep.subr.bf16.mxu0 %v291
    %400 = vmatpush1.bf16.msra.mxu0 %v290
    %401 = vmatprep.subr.bf16.mxu0 %v295
    %402 = vmatpush1.bf16.msra.mxu0 %v294
    %403 = vmatprep.subr.bf16.mxu0 %v299
    %404 = vmatpush1.bf16.msra.mxu0 %v298
    %405 = vmatprep.subr.bf16.mxu0 %v303
    %406 = vmatpush1.bf16.msra.mxu0 %v302
    %407 = vmatprep.subr.bf16.mxu0 %v307
    %408 = vmatpush1.bf16.msra.mxu0 %v306
    %409 = vmatprep.subr.bf16.mxu0 %v311
    %410 = vmatpush1.bf16.msra.mxu0 %v310
    %411 = vmatprep.subr.bf16.mxu0 0
    %412 = vmatpush1.bf16.msra.mxu0 0
    %413 = vmatprep.subr.bf16.mxu0 0
    %414 = vmatpush1.bf16.msra.mxu0 0
    %415 = vmatprep.subr.bf16.mxu0 0
    %416 = vmatpush1.bf16.msra.mxu0 0
    %417 = vmatprep.subr.bf16.mxu0 0
    %418 = vmatpush1.bf16.msra.mxu0 0
    %419 = vmatprep.subr.bf16.mxu0 0
    %420 = vmatpush1.bf16.msra.mxu0 0
    %421 = vmatprep.subr.bf16.mxu0 0
    %422 = vmatpush1.bf16.msra.mxu0 0
    %423 = vmatprep.subr.bf16.mxu0 0
    %424 = vmatpush1.bf16.msra.mxu0 0
    %425 = vmatprep.subr.bf16.mxu0 0
    %426 = vmatpush1.bf16.msra.mxu0 0
    %427 = vmatprep.mubr.bf16.mxu0 0
    %428 = vmatmul.mubr.bf16.gmra.mrb[0].mxu0 %v180
    %v429 = vpop.f32.mrb[0].mxu0
    %v430 = vadd.f32 %v165, %v429
    %v431 = vpop.f32.mrb[0].mxu0
    %v432 = vadd.f32 %v169, %v431
    %v433 = vpop.f32.mrb[0].mxu0
    %v434 = vadd.f32 %v165, %v433
    %v435 = vpop.f32.mrb[0].mxu0
    %v436 = vadd.f32 %v169, %v435
    %437 = vmatprep.mubr.bf16.mxu0 0
    %438 = vmatmul.mubr.bf16.gmra.mrb[0].mxu0 %v181
    %v439 = vpop.f32.mrb[0].mxu0
    %v440 = vadd.f32 %v165, %v439
    %v441 = vpop.f32.mrb[0].mxu0
    %v442 = vadd.f32 %v169, %v441
    %v443 = vpop.f32.mrb[0].mxu0
    %v444 = vpop.f32.mrb[0].mxu0
    %445 = vdwg.mxu0
    %v446 = vmax.f32 %v379, 0.0
    %v447 = vmax.f32 %v381, 0.0
    %v448 = vmax.f32 %v430, 0.0
    %v449 = vmax.f32 %v432, 0.0
    %v450 = vmax.f32 %v383, 0.0
    %v451 = vmax.f32 %v385, 0.0
    %v452 = vmax.f32 %v434, 0.0
    %v453 = vmax.f32 %v436, 0.0
    %v454 = vmax.f32 %v389, 0.0
    %v455 = vmax.f32 %v391, 0.0
    %v456 = vmax.f32 %v440, 0.0
    %v457 = vmax.f32 %v442, 0.0
    %v458 = vpack.c.bf16 %v450, %v446
    %v459 = vpack.c.bf16 %v451, %v447
    %v460 = vpack.c.bf16 %v452, %v448
    %v461 = vpack.c.bf16 %v453, %v449
    %v462 = vpack.c.bf16 %v454, %v454
    %v463 = vpack.c.bf16 %v455, %v455
    %v464 = vpack.c.bf16 %v456, %v456
    %v465 = vpack.c.bf16 %v457, %v457
    %v466 = vld [vmem:[#allocation8] sm:$0xff]
    %v467 = vld [vmem:[#allocation8 + $0x8] sm:$0xff]
    %v468 = vld [vmem:[#allocation8 + $0x10] sm:$0xff]
    %v469 = vld [vmem:[#allocation8 + $0x18] sm:$0xff]
    %v470 = vld [vmem:[#allocation8 + $0x20] sm:$0xff]
    %v471 = vld [vmem:[#allocation8 + $0x28] sm:$0xff]
    %v472 = vld [vmem:[#allocation8 + $0x30] sm:$0xff]
    %v473 = vld [vmem:[#allocation8 + $0x38] sm:$0xff]
    %v474 = vld [vmem:[#allocation8 + $0x40] sm:$0xff]
    %v475 = vld [vmem:[#allocation8 + $0x48] sm:$0xff]
    %v476 = vld [vmem:[#allocation8 + $0x50] sm:$0xff]
    %v477 = vld [vmem:[#allocation8 + $0x58] sm:$0xff]
    %v478 = vld [vmem:[#allocation8 + $0x60] sm:$0xff]
    %v479 = vld [vmem:[#allocation8 + $0x68] sm:$0xff]
    %v480 = vld [vmem:[#allocation8 + $0x70] sm:$0xff]
    %v481 = vld [vmem:[#allocation8 + $0x78] sm:$0xff]
    %v482 = vld [vmem:[#allocation8 + $0x80] sm:$0xff]
    %v483 = vld [vmem:[#allocation8 + $0x88] sm:$0xff]
    %v484 = vld [vmem:[#allocation8 + $0x90] sm:$0xff]
    %v485 = vld [vmem:[#allocation8 + $0x98] sm:$0xff]
    %v486 = vld [vmem:[#allocation8 + $0xa0] sm:$0xff]
    %v487 = vld [vmem:[#allocation8 + $0xa8] sm:$0xff]
    %v488 = vld [vmem:[#allocation8 + $0xb0] sm:$0xff]
    %v489 = vld [vmem:[#allocation8 + $0xb8] sm:$0xff]
    %v490 = vld [vmem:[#allocation8 + $0xc0] sm:$0xff]
    %v491 = vld [vmem:[#allocation8 + $0xc8] sm:$0xff]
    %v492 = vld [vmem:[#allocation8 + $0xd0] sm:$0xff]
    %v493 = vld [vmem:[#allocation8 + $0xd8] sm:$0xff]
    %v494 = vld [vmem:[#allocation8 + $0xe0] sm:$0xff]
    %v495 = vld [vmem:[#allocation8 + $0xe8] sm:$0xff]
    %v496 = vld [vmem:[#allocation8 + $0xf0] sm:$0xff]
    %v497 = vld [vmem:[#allocation8 + $0xf8] sm:$0xff]
    %v498 = vld [vmem:[#allocation8 + $0x100] sm:$0xff]
    %v499 = vld [vmem:[#allocation8 + $0x108] sm:$0xff]
    %v500 = vld [vmem:[#allocation8 + $0x110] sm:$0xff]
    %v501 = vld [vmem:[#allocation8 + $0x118] sm:$0xff]
    %v502 = vld [vmem:[#allocation8 + $0x120] sm:$0xff]
    %v503 = vld [vmem:[#allocation8 + $0x128] sm:$0xff]
    %v504 = vld [vmem:[#allocation8 + $0x130] sm:$0xff]
    %v505 = vld [vmem:[#allocation8 + $0x138] sm:$0xff]
    %v506 = vld [vmem:[#allocation8 + $0x140] sm:$0xff]
    %v507 = vld [vmem:[#allocation8 + $0x148] sm:$0xff]
    %v508 = vld [vmem:[#allocation8 + $0x150] sm:$0xff]
    %v509 = vld [vmem:[#allocation8 + $0x158] sm:$0xff]
    %v510 = vld [vmem:[#allocation8 + $0x160] sm:$0xff]
    %v511 = vld [vmem:[#allocation8 + $0x168] sm:$0xff]
    %v512 = vld [vmem:[#allocation8 + $0x170] sm:$0xff]
    %v513 = vld [vmem:[#allocation8 + $0x178] sm:$0xff]
    %v514 = vld [vmem:[#allocation8 + $0x180] sm:$0xff]
    %v515 = vld [vmem:[#allocation8 + $0x188] sm:$0xff]
    %v516 = vld [vmem:[#allocation8 + $0x190] sm:$0xff]
    %v517 = vld [vmem:[#allocation8 + $0x198] sm:$0xff]
    %v518 = vld [vmem:[#allocation8 + $0x1a0] sm:$0xff]
    %v519 = vld [vmem:[#allocation8 + $0x1a8] sm:$0xff]
    %v520 = vld [vmem:[#allocation8 + $0x1b0] sm:$0xff]
    %v521 = vld [vmem:[#allocation8 + $0x1b8] sm:$0xff]
    %v522 = vld [vmem:[#allocation8 + $0x1c0] sm:$0xff]
    %v523 = vld [vmem:[#allocation8 + $0x1c8] sm:$0xff]
    %v524 = vld [vmem:[#allocation8 + $0x1d0] sm:$0xff]
    %v525 = vld [vmem:[#allocation8 + $0x1d8] sm:$0xff]
    %v526 = vld [vmem:[#allocation8 + $0x1e0] sm:$0xff]
    %v527 = vld [vmem:[#allocation8 + $0x1e8] sm:$0xff]
    %v528 = vld [vmem:[#allocation8 + $0x1f0] sm:$0xff]
    %v529 = vld [vmem:[#allocation8 + $0x1f8] sm:$0xff]
    %v530 = vld [vmem:[#allocation8 + $0x200] sm:$0xff]
    %v531 = vld [vmem:[#allocation8 + $0x208] sm:$0xff]
    %v532 = vld [vmem:[#allocation8 + $0x210] sm:$0xff]
    %v533 = vld [vmem:[#allocation8 + $0x218] sm:$0xff]
    %v534 = vld [vmem:[#allocation8 + $0x220] sm:$0xff]
    %v535 = vld [vmem:[#allocation8 + $0x228] sm:$0xff]
    %v536 = vld [vmem:[#allocation8 + $0x230] sm:$0xff]
    %v537 = vld [vmem:[#allocation8 + $0x238] sm:$0xff]
    %v538 = vld [vmem:[#allocation8 + $0x240] sm:$0xff]
    %v539 = vld [vmem:[#allocation8 + $0x248] sm:$0xff]
    %v540 = vld [vmem:[#allocation8 + $0x250] sm:$0xff]
    %v541 = vld [vmem:[#allocation8 + $0x258] sm:$0xff]
    %v542 = vld [vmem:[#allocation8 + $0x260] sm:$0xff]
    %v543 = vld [vmem:[#allocation8 + $0x268] sm:$0xff]
    %v544 = vld [vmem:[#allocation8 + $0x270] sm:$0xff]
    %v545 = vld [vmem:[#allocation8 + $0x278] sm:$0xff]
    %v546 = vld [vmem:[#allocation8 + $0x280] sm:$0xff]
    %v547 = vld [vmem:[#allocation8 + $0x288] sm:$0xff]
    %v548 = vld [vmem:[#allocation8 + $0x290] sm:$0xff]
    %v549 = vld [vmem:[#allocation8 + $0x298] sm:$0xff]
    %v550 = vld [vmem:[#allocation8 + $0x2a0] sm:$0xff]
    %v551 = vld [vmem:[#allocation8 + $0x2a8] sm:$0xff]
    %v552 = vld [vmem:[#allocation8 + $0x2b0] sm:$0xff]
    %v553 = vld [vmem:[#allocation8 + $0x2b8] sm:$0xff]
    %v554 = vld [vmem:[#allocation8 + $0x2c0] sm:$0xff]
    %v555 = vld [vmem:[#allocation8 + $0x2c8] sm:$0xff]
    %v556 = vld [vmem:[#allocation8 + $0x2d0] sm:$0xff]
    %v557 = vld [vmem:[#allocation8 + $0x2d8] sm:$0xff]
    %v558 = vld [vmem:[#allocation8 + $0x2e0] sm:$0xff]
    %v559 = vld [vmem:[#allocation8 + $0x2e8] sm:$0xff]
    %v560 = vld [vmem:[#allocation8 + $0x2f0] sm:$0xff]
    %v561 = vld [vmem:[#allocation8 + $0x2f8] sm:$0xff]
    %v562 = vld [vmem:[#allocation8 + $0x300] sm:$0xff]
    %v563 = vld [vmem:[#allocation8 + $0x308] sm:$0xff]
    %v564 = vld [vmem:[#allocation8 + $0x310] sm:$0xff]
    %v565 = vld [vmem:[#allocation8 + $0x318] sm:$0xff]
    %v566 = vld [vmem:[#allocation8 + $0x320] sm:$0xff]
    %v567 = vld [vmem:[#allocation8 + $0x328] sm:$0xff]
    %v568 = vld [vmem:[#allocation8 + $0x330] sm:$0xff]
    %v569 = vld [vmem:[#allocation8 + $0x338] sm:$0xff]
    %v570 = vld [vmem:[#allocation8 + $0x340] sm:$0xff]
    %v571 = vld [vmem:[#allocation8 + $0x348] sm:$0xff]
    %v572 = vld [vmem:[#allocation8 + $0x350] sm:$0xff]
    %v573 = vld [vmem:[#allocation8 + $0x358] sm:$0xff]
    %v574 = vld [vmem:[#allocation8 + $0x360] sm:$0xff]
    %v575 = vld [vmem:[#allocation8 + $0x368] sm:$0xff]
    %v576 = vld [vmem:[#allocation8 + $0x370] sm:$0xff]
    %v577 = vld [vmem:[#allocation8 + $0x378] sm:$0xff]
    %v578 = vld [vmem:[#allocation8 + $0x380] sm:$0xff]
    %v579 = vld [vmem:[#allocation8 + $0x388] sm:$0xff]
    %v580 = vld [vmem:[#allocation8 + $0x390] sm:$0xff]
    %v581 = vld [vmem:[#allocation8 + $0x398] sm:$0xff]
    %v582 = vld [vmem:[#allocation8 + $0x3a0] sm:$0xff]
    %v583 = vld [vmem:[#allocation8 + $0x3a8] sm:$0xff]
    %v584 = vld [vmem:[#allocation8 + $0x3b0] sm:$0xff]
    %v585 = vld [vmem:[#allocation8 + $0x3b8] sm:$0xff]
    %v586 = vld [vmem:[#allocation8 + $0x3c0] sm:$0xff]
    %v587 = vld [vmem:[#allocation8 + $0x3c8] sm:$0xff]
    %v588 = vld [vmem:[#allocation8 + $0x3d0] sm:$0xff]
    %v589 = vld [vmem:[#allocation8 + $0x3d8] sm:$0xff]
    %v590 = vld [vmem:[#allocation8 + $0x3e0] sm:$0xff]
    %v591 = vld [vmem:[#allocation8 + $0x3e8] sm:$0xff]
    %v592 = vld [vmem:[#allocation8 + $0x3f0] sm:$0xff]
    %v593 = vld [vmem:[#allocation8 + $0x3f8] sm:$0xff]
    %v594 = vld [vmem:[#allocation8 + $0x400] sm:$0xff]
    %v595 = vld [vmem:[#allocation8 + $0x408] sm:$0xff]
    %v596 = vld [vmem:[#allocation8 + $0x410] sm:$0xff]
    %v597 = vld [vmem:[#allocation8 + $0x418] sm:$0xff]
    %v598 = vld [vmem:[#allocation8 + $0x420] sm:$0xff]
    %v599 = vld [vmem:[#allocation8 + $0x428] sm:$0xff]
    %v600 = vld [vmem:[#allocation8 + $0x430] sm:$0xff]
    %v601 = vld [vmem:[#allocation8 + $0x438] sm:$0xff]
    %v602 = vld [vmem:[#allocation8 + $0x440] sm:$0xff]
    %v603 = vld [vmem:[#allocation8 + $0x448] sm:$0xff]
    %v604 = vld [vmem:[#allocation8 + $0x450] sm:$0xff]
    %v605 = vld [vmem:[#allocation8 + $0x458] sm:$0xff]
    %v606 = vld [vmem:[#allocation8 + $0x460] sm:$0xff]
    %v607 = vld [vmem:[#allocation8 + $0x468] sm:$0xff]
    %v608 = vld [vmem:[#allocation8 + $0x470] sm:$0xff]
    %v609 = vld [vmem:[#allocation8 + $0x478] sm:$0xff]
    %v610 = vld [vmem:[#allocation8 + $0x480] sm:$0xff]
    %v611 = vld [vmem:[#allocation8 + $0x488] sm:$0xff]
    %v612 = vld [vmem:[#allocation8 + $0x490] sm:$0xff]
    %v613 = vld [vmem:[#allocation8 + $0x498] sm:$0xff]
    %v614 = vld [vmem:[#allocation8 + $0x4a0] sm:$0xff]
    %v615 = vld [vmem:[#allocation8 + $0x4a8] sm:$0xff]
    %v616 = vld [vmem:[#allocation8 + $0x4b0] sm:$0xff]
    %v617 = vld [vmem:[#allocation8 + $0x4b8] sm:$0xff]
    %v618 = vld [vmem:[#allocation8 + $0x4c0] sm:$0xff]
    %v619 = vld [vmem:[#allocation8 + $0x4c8] sm:$0xff]
    %v620 = vld [vmem:[#allocation8 + $0x4d0] sm:$0xff]
    %v621 = vld [vmem:[#allocation8 + $0x4d8] sm:$0xff]
    %v622 = vld [vmem:[#allocation8 + $0x4e0] sm:$0xff]
    %v623 = vld [vmem:[#allocation8 + $0x4e8] sm:$0xff]
    %v624 = vld [vmem:[#allocation8 + $0x4f0] sm:$0xff]
    %v625 = vld [vmem:[#allocation8 + $0x4f8] sm:$0xff]
    %v626 = vld [vmem:[#allocation8 + $0x500] sm:$0xff]
    %v627 = vld [vmem:[#allocation8 + $0x508] sm:$0xff]
    %v628 = vld [vmem:[#allocation8 + $0x510] sm:$0xff]
    %v629 = vld [vmem:[#allocation8 + $0x518] sm:$0xff]
    %v630 = vld [vmem:[#allocation8 + $0x520] sm:$0xff]
    %v631 = vld [vmem:[#allocation8 + $0x528] sm:$0xff]
    %v632 = vld [vmem:[#allocation8 + $0x530] sm:$0xff]
    %v633 = vld [vmem:[#allocation8 + $0x538] sm:$0xff]
    %v634 = vld [vmem:[#allocation8 + $0x540] sm:$0xff]
    %v635 = vld [vmem:[#allocation8 + $0x548] sm:$0xff]
    %v636 = vld [vmem:[#allocation8 + $0x550] sm:$0xff]
    %v637 = vld [vmem:[#allocation8 + $0x558] sm:$0xff]
    %v638 = vld [vmem:[#allocation8 + $0x560] sm:$0xff]
    %v639 = vld [vmem:[#allocation8 + $0x568] sm:$0xff]
    %v640 = vld [vmem:[#allocation8 + $0x570] sm:$0xff]
    %v641 = vld [vmem:[#allocation8 + $0x578] sm:$0xff]
    %v642 = vld [vmem:[#allocation8 + $0x580] sm:$0xff]
    %v643 = vld [vmem:[#allocation8 + $0x588] sm:$0xff]
    %v644 = vld [vmem:[#allocation8 + $0x590] sm:$0xff]
    %v645 = vld [vmem:[#allocation8 + $0x598] sm:$0xff]
    %v646 = vld [vmem:[#allocation8 + $0x5a0] sm:$0xff]
    %v647 = vld [vmem:[#allocation8 + $0x5a8] sm:$0xff]
    %v648 = vld [vmem:[#allocation8 + $0x5b0] sm:$0xff]
    %v649 = vld [vmem:[#allocation8 + $0x5b8] sm:$0xff]
    %v650 = vld [vmem:[#allocation8 + $0x5c0] sm:$0xff]
    %v651 = vld [vmem:[#allocation8 + $0x5c8] sm:$0xff]
    %v652 = vld [vmem:[#allocation8 + $0x5d0] sm:$0xff]
    %v653 = vld [vmem:[#allocation8 + $0x5d8] sm:$0xff]
    %v654 = vld [vmem:[#allocation8 + $0x5e0] sm:$0xff]
    %v655 = vld [vmem:[#allocation8 + $0x5e8] sm:$0xff]
    %v656 = vld [vmem:[#allocation8 + $0x5f0] sm:$0xff]
    %v657 = vld [vmem:[#allocation8 + $0x5f8] sm:$0xff]
    %v658 = vld [vmem:[#allocation8 + $0x600] sm:$0xff]
    %v659 = vld [vmem:[#allocation8 + $0x608] sm:$0xff]
    %v660 = vld [vmem:[#allocation8 + $0x610] sm:$0xff]
    %v661 = vld [vmem:[#allocation8 + $0x618] sm:$0xff]
    %v662 = vld [vmem:[#allocation8 + $0x620] sm:$0xff]
    %v663 = vld [vmem:[#allocation8 + $0x628] sm:$0xff]
    %v664 = vld [vmem:[#allocation8 + $0x630] sm:$0xff]
    %v665 = vld [vmem:[#allocation8 + $0x638] sm:$0xff]
    %v666 = vld [vmem:[#allocation8 + $0x640] sm:$0xff]
    %v667 = vld [vmem:[#allocation8 + $0x648] sm:$0xff]
    %v668 = vld [vmem:[#allocation8 + $0x650] sm:$0xff]
    %v669 = vld [vmem:[#allocation8 + $0x658] sm:$0xff]
    %v670 = vld [vmem:[#allocation8 + $0x660] sm:$0xff]
    %v671 = vld [vmem:[#allocation8 + $0x668] sm:$0xff]
    %v672 = vld [vmem:[#allocation8 + $0x670] sm:$0xff]
    %v673 = vld [vmem:[#allocation8 + $0x678] sm:$0xff]
    %v674 = vld [vmem:[#allocation8 + $0x680] sm:$0xff]
    %v675 = vld [vmem:[#allocation8 + $0x688] sm:$0xff]
    %v676 = vld [vmem:[#allocation8 + $0x690] sm:$0xff]
    %v677 = vld [vmem:[#allocation8 + $0x698] sm:$0xff]
    %v678 = vld [vmem:[#allocation8 + $0x6a0] sm:$0xff]
    %v679 = vld [vmem:[#allocation8 + $0x6a8] sm:$0xff]
    %v680 = vld [vmem:[#allocation8 + $0x6b0] sm:$0xff]
    %v681 = vld [vmem:[#allocation8 + $0x6b8] sm:$0xff]
    %v682 = vld [vmem:[#allocation8 + $0x6c0] sm:$0xff]
    %v683 = vld [vmem:[#allocation8 + $0x6c8] sm:$0xff]
    %v684 = vld [vmem:[#allocation8 + $0x6d0] sm:$0xff]
    %v685 = vld [vmem:[#allocation8 + $0x6d8] sm:$0xff]
    %v686 = vld [vmem:[#allocation8 + $0x6e0] sm:$0xff]
    %v687 = vld [vmem:[#allocation8 + $0x6e8] sm:$0xff]
    %v688 = vld [vmem:[#allocation8 + $0x6f0] sm:$0xff]
    %v689 = vld [vmem:[#allocation8 + $0x6f8] sm:$0xff]
    %v690 = vld [vmem:[#allocation8 + $0x700] sm:$0xff]
    %v691 = vld [vmem:[#allocation8 + $0x708] sm:$0xff]
    %v692 = vld [vmem:[#allocation8 + $0x710] sm:$0xff]
    %v693 = vld [vmem:[#allocation8 + $0x718] sm:$0xff]
    %v694 = vld [vmem:[#allocation8 + $0x720] sm:$0xff]
    %v695 = vld [vmem:[#allocation8 + $0x728] sm:$0xff]
    %v696 = vld [vmem:[#allocation8 + $0x730] sm:$0xff]
    %v697 = vld [vmem:[#allocation8 + $0x738] sm:$0xff]
    %v698 = vld [vmem:[#allocation8 + $0x740] sm:$0xff]
    %v699 = vld [vmem:[#allocation8 + $0x748] sm:$0xff]
    %v700 = vld [vmem:[#allocation8 + $0x750] sm:$0xff]
    %v701 = vld [vmem:[#allocation8 + $0x758] sm:$0xff]
    %v702 = vld [vmem:[#allocation8 + $0x760] sm:$0xff]
    %v703 = vld [vmem:[#allocation8 + $0x768] sm:$0xff]
    %v704 = vld [vmem:[#allocation8 + $0x770] sm:$0xff]
    %v705 = vld [vmem:[#allocation8 + $0x778] sm:$0xff]
    %v706 = vld [vmem:[#allocation8 + $0x780] sm:$0xff]
    %v707 = vld [vmem:[#allocation8 + $0x788] sm:$0xff]
    %v708 = vld [vmem:[#allocation8 + $0x790] sm:$0xff]
    %v709 = vld [vmem:[#allocation8 + $0x798] sm:$0xff]
    %v710 = vld [vmem:[#allocation8 + $0x7a0] sm:$0xff]
    %v711 = vld [vmem:[#allocation8 + $0x7a8] sm:$0xff]
    %v712 = vld [vmem:[#allocation8 + $0x7b0] sm:$0xff]
    %v713 = vld [vmem:[#allocation8 + $0x7b8] sm:$0xff]
    %v714 = vld [vmem:[#allocation8 + $0x7c0] sm:$0xff]
    %v715 = vld [vmem:[#allocation8 + $0x7c8] sm:$0xff]
    %v716 = vld [vmem:[#allocation8 + $0x7d0] sm:$0xff]
    %v717 = vld [vmem:[#allocation8 + $0x7d8] sm:$0xff]
    %v718 = vld [vmem:[#allocation8 + $0x7e0] sm:$0xff]
    %v719 = vld [vmem:[#allocation8 + $0x7e8] sm:$0xff]
    %v720 = vld [vmem:[#allocation8 + $0x7f0] sm:$0xff]
    %v721 = vld [vmem:[#allocation8 + $0x7f8] sm:$0xff]
    %v726 = vrot.slane %v458, 4
    %v727 = vrot.slane %v459, 4
    %v728 = vrot.slane %v460, 4
    %v729 = vrot.slane %v461, 4
    %v862 = vunpack.c.l.b16 %v594
    %v863 = vunpack.c.h.b16 %v594
    %v864 = vunpack.c.l.b16 %v595
    %v865 = vunpack.c.h.b16 %v595
    %v866 = vunpack.c.l.b16 %v596
    %v867 = vunpack.c.h.b16 %v596
    %v868 = vunpack.c.l.b16 %v597
    %v869 = vunpack.c.h.b16 %v597
    %v870 = vunpack.c.l.b16 %v598
    %v871 = vunpack.c.h.b16 %v598
    %v872 = vunpack.c.l.b16 %v599
    %v873 = vunpack.c.h.b16 %v599
    %v874 = vunpack.c.l.b16 %v600
    %v875 = vunpack.c.h.b16 %v600
    %v876 = vunpack.c.l.b16 %v601
    %v877 = vunpack.c.h.b16 %v601
    %v878 = vunpack.c.l.b16 %v602
    %v879 = vunpack.c.h.b16 %v602
    %v880 = vunpack.c.l.b16 %v603
    %v881 = vunpack.c.h.b16 %v603
    %v882 = vunpack.c.l.b16 %v604
    %v883 = vunpack.c.h.b16 %v604
    %v884 = vunpack.c.l.b16 %v605
    %v885 = vunpack.c.h.b16 %v605
    %v886 = vunpack.c.l.b16 %v606
    %v887 = vunpack.c.h.b16 %v606
    %v888 = vunpack.c.l.b16 %v607
    %v889 = vunpack.c.h.b16 %v607
    %v890 = vunpack.c.l.b16 %v608
    %v891 = vunpack.c.h.b16 %v608
    %v892 = vunpack.c.l.b16 %v609
    %v893 = vunpack.c.h.b16 %v609
    %v894 = vunpack.c.l.b16 %v610
    %v895 = vunpack.c.h.b16 %v610
    %v896 = vunpack.c.l.b16 %v611
    %v897 = vunpack.c.h.b16 %v611
    %v898 = vunpack.c.l.b16 %v612
    %v899 = vunpack.c.h.b16 %v612
    %v900 = vunpack.c.l.b16 %v613
    %v901 = vunpack.c.h.b16 %v613
    %v902 = vunpack.c.l.b16 %v614
    %v903 = vunpack.c.h.b16 %v614
    %v904 = vunpack.c.l.b16 %v615
    %v905 = vunpack.c.h.b16 %v615
    %v906 = vunpack.c.l.b16 %v616
    %v907 = vunpack.c.h.b16 %v616
    %v908 = vunpack.c.l.b16 %v617
    %v909 = vunpack.c.h.b16 %v617
    %v910 = vunpack.c.l.b16 %v618
    %v911 = vunpack.c.h.b16 %v618
    %v912 = vunpack.c.l.b16 %v619
    %v913 = vunpack.c.h.b16 %v619
    %v914 = vunpack.c.l.b16 %v620
    %v915 = vunpack.c.h.b16 %v620
    %v916 = vunpack.c.l.b16 %v621
    %v917 = vunpack.c.h.b16 %v621
    %v918 = vunpack.c.l.b16 %v622
    %v919 = vunpack.c.h.b16 %v622
    %v920 = vunpack.c.l.b16 %v623
    %v921 = vunpack.c.h.b16 %v623
    %v922 = vunpack.c.l.b16 %v624
    %v923 = vunpack.c.h.b16 %v624
    %v924 = vunpack.c.l.b16 %v625
    %v925 = vunpack.c.h.b16 %v625
    %v926 = vunpack.c.l.b16 %v626
    %v927 = vunpack.c.h.b16 %v626
    %v928 = vunpack.c.l.b16 %v627
    %v929 = vunpack.c.h.b16 %v627
    %v930 = vunpack.c.l.b16 %v628
    %v931 = vunpack.c.h.b16 %v628
    %v932 = vunpack.c.l.b16 %v629
    %v933 = vunpack.c.h.b16 %v629
    %v934 = vunpack.c.l.b16 %v630
    %v935 = vunpack.c.h.b16 %v630
    %v936 = vunpack.c.l.b16 %v631
    %v937 = vunpack.c.h.b16 %v631
    %v938 = vunpack.c.l.b16 %v632
    %v939 = vunpack.c.h.b16 %v632
    %v940 = vunpack.c.l.b16 %v633
    %v941 = vunpack.c.h.b16 %v633
    %v942 = vunpack.c.l.b16 %v634
    %v943 = vunpack.c.h.b16 %v634
    %v944 = vunpack.c.l.b16 %v635
    %v945 = vunpack.c.h.b16 %v635
    %v946 = vunpack.c.l.b16 %v636
    %v947 = vunpack.c.h.b16 %v636
    %v948 = vunpack.c.l.b16 %v637
    %v949 = vunpack.c.h.b16 %v637
    %v950 = vunpack.c.l.b16 %v638
    %v951 = vunpack.c.h.b16 %v638
    %v952 = vunpack.c.l.b16 %v639
    %v953 = vunpack.c.h.b16 %v639
    %v954 = vunpack.c.l.b16 %v640
    %v955 = vunpack.c.h.b16 %v640
    %v956 = vunpack.c.l.b16 %v641
    %v957 = vunpack.c.h.b16 %v641
    %v958 = vunpack.c.l.b16 %v642
    %v959 = vunpack.c.h.b16 %v642
    %v960 = vunpack.c.l.b16 %v643
    %v961 = vunpack.c.h.b16 %v643
    %v962 = vunpack.c.l.b16 %v644
    %v963 = vunpack.c.h.b16 %v644
    %v964 = vunpack.c.l.b16 %v645
    %v965 = vunpack.c.h.b16 %v645
    %v966 = vunpack.c.l.b16 %v646
    %v967 = vunpack.c.h.b16 %v646
    %v968 = vunpack.c.l.b16 %v647
    %v969 = vunpack.c.h.b16 %v647
    %v970 = vunpack.c.l.b16 %v648
    %v971 = vunpack.c.h.b16 %v648
    %v972 = vunpack.c.l.b16 %v649
    %v973 = vunpack.c.h.b16 %v649
    %v974 = vunpack.c.l.b16 %v650
    %v975 = vunpack.c.h.b16 %v650
    %v976 = vunpack.c.l.b16 %v651
    %v977 = vunpack.c.h.b16 %v651
    %v978 = vunpack.c.l.b16 %v652
    %v979 = vunpack.c.h.b16 %v652
    %v980 = vunpack.c.l.b16 %v653
    %v981 = vunpack.c.h.b16 %v653
    %v982 = vunpack.c.l.b16 %v654
    %v983 = vunpack.c.h.b16 %v654
    %v984 = vunpack.c.l.b16 %v655
    %v985 = vunpack.c.h.b16 %v655
    %v986 = vunpack.c.l.b16 %v656
    %v987 = vunpack.c.h.b16 %v656
    %v988 = vunpack.c.l.b16 %v657
    %v989 = vunpack.c.h.b16 %v657
    %v990 = vunpack.c.l.b16 %v658
    %v991 = vunpack.c.h.b16 %v658
    %v992 = vunpack.c.l.b16 %v659
    %v993 = vunpack.c.h.b16 %v659
    %v994 = vunpack.c.l.b16 %v660
    %v995 = vunpack.c.h.b16 %v660
    %v996 = vunpack.c.l.b16 %v661
    %v997 = vunpack.c.h.b16 %v661
    %v998 = vunpack.c.l.b16 %v662
    %v999 = vunpack.c.h.b16 %v662
    %v1000 = vunpack.c.l.b16 %v663
    %v1001 = vunpack.c.h.b16 %v663
    %v1002 = vunpack.c.l.b16 %v664
    %v1003 = vunpack.c.h.b16 %v664
    %v1004 = vunpack.c.l.b16 %v665
    %v1005 = vunpack.c.h.b16 %v665
    %v1006 = vunpack.c.l.b16 %v666
    %v1007 = vunpack.c.h.b16 %v666
    %v1008 = vunpack.c.l.b16 %v667
    %v1009 = vunpack.c.h.b16 %v667
    %v1010 = vunpack.c.l.b16 %v668
    %v1011 = vunpack.c.h.b16 %v668
    %v1012 = vunpack.c.l.b16 %v669
    %v1013 = vunpack.c.h.b16 %v669
    %v1014 = vunpack.c.l.b16 %v670
    %v1015 = vunpack.c.h.b16 %v670
    %v1016 = vunpack.c.l.b16 %v671
    %v1017 = vunpack.c.h.b16 %v671
    %v1018 = vunpack.c.l.b16 %v672
    %v1019 = vunpack.c.h.b16 %v672
    %v1020 = vunpack.c.l.b16 %v673
    %v1021 = vunpack.c.h.b16 %v673
    %v1022 = vunpack.c.l.b16 %v674
    %v1023 = vunpack.c.h.b16 %v674
    %v1024 = vunpack.c.l.b16 %v675
    %v1025 = vunpack.c.h.b16 %v675
    %v1026 = vunpack.c.l.b16 %v676
    %v1027 = vunpack.c.h.b16 %v676
    %v1028 = vunpack.c.l.b16 %v677
    %v1029 = vunpack.c.h.b16 %v677
    %v1030 = vunpack.c.l.b16 %v678
    %v1031 = vunpack.c.h.b16 %v678
    %v1032 = vunpack.c.l.b16 %v679
    %v1033 = vunpack.c.h.b16 %v679
    %v1034 = vunpack.c.l.b16 %v680
    %v1035 = vunpack.c.h.b16 %v680
    %v1036 = vunpack.c.l.b16 %v681
    %v1037 = vunpack.c.h.b16 %v681
    %v1038 = vunpack.c.l.b16 %v682
    %v1039 = vunpack.c.h.b16 %v682
    %v1040 = vunpack.c.l.b16 %v683
    %v1041 = vunpack.c.h.b16 %v683
    %v1042 = vunpack.c.l.b16 %v684
    %v1043 = vunpack.c.h.b16 %v684
    %v1044 = vunpack.c.l.b16 %v685
    %v1045 = vunpack.c.h.b16 %v685
    %v1046 = vunpack.c.l.b16 %v686
    %v1047 = vunpack.c.h.b16 %v686
    %v1048 = vunpack.c.l.b16 %v687
    %v1049 = vunpack.c.h.b16 %v687
    %v1050 = vunpack.c.l.b16 %v688
    %v1051 = vunpack.c.h.b16 %v688
    %v1052 = vunpack.c.l.b16 %v689
    %v1053 = vunpack.c.h.b16 %v689
    %v1054 = vunpack.c.l.b16 %v690
    %v1055 = vunpack.c.h.b16 %v690
    %v1056 = vunpack.c.l.b16 %v691
    %v1057 = vunpack.c.h.b16 %v691
    %v1058 = vunpack.c.l.b16 %v692
    %v1059 = vunpack.c.h.b16 %v692
    %v1060 = vunpack.c.l.b16 %v693
    %v1061 = vunpack.c.h.b16 %v693
    %v1062 = vunpack.c.l.b16 %v694
    %v1063 = vunpack.c.h.b16 %v694
    %v1064 = vunpack.c.l.b16 %v695
    %v1065 = vunpack.c.h.b16 %v695
    %v1066 = vunpack.c.l.b16 %v696
    %v1067 = vunpack.c.h.b16 %v696
    %v1068 = vunpack.c.l.b16 %v697
    %v1069 = vunpack.c.h.b16 %v697
    %v1070 = vunpack.c.l.b16 %v698
    %v1071 = vunpack.c.h.b16 %v698
    %v1072 = vunpack.c.l.b16 %v699
    %v1073 = vunpack.c.h.b16 %v699
    %v1074 = vunpack.c.l.b16 %v700
    %v1075 = vunpack.c.h.b16 %v700
    %v1076 = vunpack.c.l.b16 %v701
    %v1077 = vunpack.c.h.b16 %v701
    %v1078 = vunpack.c.l.b16 %v702
    %v1079 = vunpack.c.h.b16 %v702
    %v1080 = vunpack.c.l.b16 %v703
    %v1081 = vunpack.c.h.b16 %v703
    %v1082 = vunpack.c.l.b16 %v704
    %v1083 = vunpack.c.h.b16 %v704
    %v1084 = vunpack.c.l.b16 %v705
    %v1085 = vunpack.c.h.b16 %v705
    %v1086 = vunpack.c.l.b16 %v706
    %v1087 = vunpack.c.h.b16 %v706
    %v1088 = vunpack.c.l.b16 %v707
    %v1089 = vunpack.c.h.b16 %v707
    %v1090 = vunpack.c.l.b16 %v708
    %v1091 = vunpack.c.h.b16 %v708
    %v1092 = vunpack.c.l.b16 %v709
    %v1093 = vunpack.c.h.b16 %v709
    %v1094 = vunpack.c.l.b16 %v710
    %v1095 = vunpack.c.h.b16 %v710
    %v1096 = vunpack.c.l.b16 %v711
    %v1097 = vunpack.c.h.b16 %v711
    %v1098 = vunpack.c.l.b16 %v712
    %v1099 = vunpack.c.h.b16 %v712
    %v1100 = vunpack.c.l.b16 %v713
    %v1101 = vunpack.c.h.b16 %v713
    %v1102 = vunpack.c.l.b16 %v714
    %v1103 = vunpack.c.h.b16 %v714
    %v1104 = vunpack.c.l.b16 %v715
    %v1105 = vunpack.c.h.b16 %v715
    %v1106 = vunpack.c.l.b16 %v716
    %v1107 = vunpack.c.h.b16 %v716
    %v1108 = vunpack.c.l.b16 %v717
    %v1109 = vunpack.c.h.b16 %v717
    %v1110 = vunpack.c.l.b16 %v718
    %v1111 = vunpack.c.h.b16 %v718
    %v1112 = vunpack.c.l.b16 %v719
    %v1113 = vunpack.c.h.b16 %v719
    %v1114 = vunpack.c.l.b16 %v720
    %v1115 = vunpack.c.h.b16 %v720
    %v1116 = vunpack.c.l.b16 %v721
    %v1117 = vunpack.c.h.b16 %v721
    %v1118 = vpack.c.b16 %v866, %v862
    %v1119 = vpack.c.b16 %v867, %v863
    %v1120 = vpack.c.b16 %v868, %v864
    %v1121 = vpack.c.b16 %v869, %v865
    %v1122 = vpack.c.b16 %v874, %v870
    %v1123 = vpack.c.b16 %v875, %v871
    %v1124 = vpack.c.b16 %v876, %v872
    %v1125 = vpack.c.b16 %v877, %v873
    %v1126 = vpack.c.b16 %v882, %v878
    %v1127 = vpack.c.b16 %v883, %v879
    %v1128 = vpack.c.b16 %v884, %v880
    %v1129 = vpack.c.b16 %v885, %v881
    %v1130 = vpack.c.b16 %v890, %v886
    %v1131 = vpack.c.b16 %v891, %v887
    %v1132 = vpack.c.b16 %v892, %v888
    %v1133 = vpack.c.b16 %v893, %v889
    %v1134 = vpack.c.b16 %v898, %v894
    %v1135 = vpack.c.b16 %v899, %v895
    %v1136 = vpack.c.b16 %v900, %v896
    %v1137 = vpack.c.b16 %v901, %v897
    %v1138 = vpack.c.b16 %v906, %v902
    %v1139 = vpack.c.b16 %v907, %v903
    %v1140 = vpack.c.b16 %v908, %v904
    %v1141 = vpack.c.b16 %v909, %v905
    %v1142 = vpack.c.b16 %v914, %v910
    %v1143 = vpack.c.b16 %v915, %v911
    %v1144 = vpack.c.b16 %v916, %v912
    %v1145 = vpack.c.b16 %v917, %v913
    %v1146 = vpack.c.b16 %v922, %v918
    %v1147 = vpack.c.b16 %v923, %v919
    %v1148 = vpack.c.b16 %v924, %v920
    %v1149 = vpack.c.b16 %v925, %v921
    %v1150 = vpack.c.b16 %v930, %v926
    %v1151 = vpack.c.b16 %v931, %v927
    %v1152 = vpack.c.b16 %v932, %v928
    %v1153 = vpack.c.b16 %v933, %v929
    %v1154 = vpack.c.b16 %v938, %v934
    %v1155 = vpack.c.b16 %v939, %v935
    %v1156 = vpack.c.b16 %v940, %v936
    %v1157 = vpack.c.b16 %v941, %v937
    %v1158 = vpack.c.b16 %v946, %v942
    %v1159 = vpack.c.b16 %v947, %v943
    %v1160 = vpack.c.b16 %v948, %v944
    %v1161 = vpack.c.b16 %v949, %v945
    %v1162 = vpack.c.b16 %v954, %v950
    %v1163 = vpack.c.b16 %v955, %v951
    %v1164 = vpack.c.b16 %v956, %v952
    %v1165 = vpack.c.b16 %v957, %v953
    %v1166 = vpack.c.b16 %v962, %v958
    %v1167 = vpack.c.b16 %v963, %v959
    %v1168 = vpack.c.b16 %v964, %v960
    %v1169 = vpack.c.b16 %v965, %v961
    %v1170 = vpack.c.b16 %v970, %v966
    %v1171 = vpack.c.b16 %v971, %v967
    %v1172 = vpack.c.b16 %v972, %v968
    %v1173 = vpack.c.b16 %v973, %v969
    %v1174 = vpack.c.b16 %v978, %v974
    %v1175 = vpack.c.b16 %v979, %v975
    %v1176 = vpack.c.b16 %v980, %v976
    %v1177 = vpack.c.b16 %v981, %v977
    %v1178 = vpack.c.b16 %v986, %v982
    %v1179 = vpack.c.b16 %v987, %v983
    %v1180 = vpack.c.b16 %v988, %v984
    %v1181 = vpack.c.b16 %v989, %v985
    %v1182 = vpack.c.b16 %v994, %v990
    %v1183 = vpack.c.b16 %v995, %v991
    %v1184 = vpack.c.b16 %v996, %v992
    %v1185 = vpack.c.b16 %v997, %v993
    %v1186 = vpack.c.b16 %v1002, %v998
    %v1187 = vpack.c.b16 %v1003, %v999
    %v1188 = vpack.c.b16 %v1004, %v1000
    %v1189 = vpack.c.b16 %v1005, %v1001
    %v1190 = vpack.c.b16 %v1010, %v1006
    %v1191 = vpack.c.b16 %v1011, %v1007
    %v1192 = vpack.c.b16 %v1012, %v1008
    %v1193 = vpack.c.b16 %v1013, %v1009
    %v1194 = vpack.c.b16 %v1018, %v1014
    %v1195 = vpack.c.b16 %v1019, %v1015
    %v1196 = vpack.c.b16 %v1020, %v1016
    %v1197 = vpack.c.b16 %v1021, %v1017
    %v1198 = vpack.c.b16 %v1026, %v1022
    %v1199 = vpack.c.b16 %v1027, %v1023
    %v1200 = vpack.c.b16 %v1028, %v1024
    %v1201 = vpack.c.b16 %v1029, %v1025
    %v1202 = vpack.c.b16 %v1034, %v1030
    %v1203 = vpack.c.b16 %v1035, %v1031
    %v1204 = vpack.c.b16 %v1036, %v1032
    %v1205 = vpack.c.b16 %v1037, %v1033
    %v1206 = vpack.c.b16 %v1042, %v1038
    %v1207 = vpack.c.b16 %v1043, %v1039
    %v1208 = vpack.c.b16 %v1044, %v1040
    %v1209 = vpack.c.b16 %v1045, %v1041
    %v1210 = vpack.c.b16 %v1050, %v1046
    %v1211 = vpack.c.b16 %v1051, %v1047
    %v1212 = vpack.c.b16 %v1052, %v1048
    %v1213 = vpack.c.b16 %v1053, %v1049
    %v1214 = vpack.c.b16 %v1058, %v1054
    %v1215 = vpack.c.b16 %v1059, %v1055
    %v1216 = vpack.c.b16 %v1060, %v1056
    %v1217 = vpack.c.b16 %v1061, %v1057
    %v1218 = vpack.c.b16 %v1066, %v1062
    %v1219 = vpack.c.b16 %v1067, %v1063
    %v1220 = vpack.c.b16 %v1068, %v1064
    %v1221 = vpack.c.b16 %v1069, %v1065
    %v1222 = vpack.c.b16 %v1074, %v1070
    %v1223 = vpack.c.b16 %v1075, %v1071
    %v1224 = vpack.c.b16 %v1076, %v1072
    %v1225 = vpack.c.b16 %v1077, %v1073
    %v1226 = vpack.c.b16 %v1082, %v1078
    %v1227 = vpack.c.b16 %v1083, %v1079
    %v1228 = vpack.c.b16 %v1084, %v1080
    %v1229 = vpack.c.b16 %v1085, %v1081
    %v1230 = vpack.c.b16 %v1090, %v1086
    %v1231 = vpack.c.b16 %v1091, %v1087
    %v1232 = vpack.c.b16 %v1092, %v1088
    %v1233 = vpack.c.b16 %v1093, %v1089
    %v1234 = vpack.c.b16 %v1098, %v1094
    %v1235 = vpack.c.b16 %v1099, %v1095
    %v1236 = vpack.c.b16 %v1100, %v1096
    %v1237 = vpack.c.b16 %v1101, %v1097
    %v1238 = vpack.c.b16 %v1106, %v1102
    %v1239 = vpack.c.b16 %v1107, %v1103
    %v1240 = vpack.c.b16 %v1108, %v1104
    %v1241 = vpack.c.b16 %v1109, %v1105
    %v1242 = vpack.c.b16 %v1114, %v1110
    %v1243 = vpack.c.b16 %v1115, %v1111
    %v1244 = vpack.c.b16 %v1116, %v1112
    %v1245 = vpack.c.b16 %v1117, %v1113
    %1374 = vmatprep.subr.bf16.mxu0 %v1119
    %1375 = vmatpush1.bf16.msra.mxu0 %v1118
    %1376 = vmatprep.subr.bf16.mxu0 %v1123
    %1377 = vmatpush1.bf16.msra.mxu0 %v1122
    %1378 = vmatprep.subr.bf16.mxu0 %v1127
    %1379 = vmatpush1.bf16.msra.mxu0 %v1126
    %1380 = vmatprep.subr.bf16.mxu0 %v1131
    %1381 = vmatpush1.bf16.msra.mxu0 %v1130
    %1382 = vmatprep.subr.bf16.mxu0 %v1135
    %1383 = vmatpush1.bf16.msra.mxu0 %v1134
    %1384 = vmatprep.subr.bf16.mxu0 %v1139
    %1385 = vmatpush1.bf16.msra.mxu0 %v1138
    %1386 = vmatprep.subr.bf16.mxu0 %v1143
    %1387 = vmatpush1.bf16.msra.mxu0 %v1142
    %1388 = vmatprep.subr.bf16.mxu0 %v1147
    %1389 = vmatpush1.bf16.msra.mxu0 %v1146
    %1390 = vmatprep.subr.bf16.mxu0 %v1151
    %1391 = vmatpush1.bf16.msra.mxu0 %v1150
    %1392 = vmatprep.subr.bf16.mxu0 %v1155
    %1393 = vmatpush1.bf16.msra.mxu0 %v1154
    %1394 = vmatprep.subr.bf16.mxu0 %v1159
    %1395 = vmatpush1.bf16.msra.mxu0 %v1158
    %1396 = vmatprep.subr.bf16.mxu0 %v1163
    %1397 = vmatpush1.bf16.msra.mxu0 %v1162
    %1398 = vmatprep.subr.bf16.mxu0 %v1167
    %1399 = vmatpush1.bf16.msra.mxu0 %v1166
    %1400 = vmatprep.subr.bf16.mxu0 %v1171
    %1401 = vmatpush1.bf16.msra.mxu0 %v1170
    %1402 = vmatprep.subr.bf16.mxu0 %v1175
    %1403 = vmatpush1.bf16.msra.mxu0 %v1174
    %1404 = vmatprep.subr.bf16.mxu0 %v1179
    %1405 = vmatpush1.bf16.msra.mxu0 %v1178
    %1406 = vmatprep.mubr.bf16.mxu0 %v727
    %1407 = vmatmul.mubr.bf16.gmra.mrb[0].mxu0 %v726
    %v1408 = vpop.f32.mrb[0].mxu0
    %v1409 = vadd.f32 0.0, %v1408
    %v1410 = vpop.f32.mrb[0].mxu0
    %v1411 = vadd.f32 0.0, %v1410
    %v1412 = vpop.f32.mrb[0].mxu0
    %v1413 = vpop.f32.mrb[0].mxu0
    %1414 = vdwg.mxu0
    %1415 = vmatprep.subr.bf16.mxu0 %v1183
    %1416 = vmatpush1.bf16.msra.mxu0 %v1182
    %1417 = vmatprep.subr.bf16.mxu0 %v1187
    %1418 = vmatpush1.bf16.msra.mxu0 %v1186
    %1419 = vmatprep.subr.bf16.mxu0 %v1191
    %1420 = vmatpush1.bf16.msra.mxu0 %v1190
    %1421 = vmatprep.subr.bf16.mxu0 %v1195
    %1422 = vmatpush1.bf16.msra.mxu0 %v1194
    %1423 = vmatprep.subr.bf16.mxu0 %v1199
    %1424 = vmatpush1.bf16.msra.mxu0 %v1198
    %1425 = vmatprep.subr.bf16.mxu0 %v1203
    %1426 = vmatpush1.bf16.msra.mxu0 %v1202
    %1427 = vmatprep.subr.bf16.mxu0 %v1207
    %1428 = vmatpush1.bf16.msra.mxu0 %v1206
    %1429 = vmatprep.subr.bf16.mxu0 %v1211
    %1430 = vmatpush1.bf16.msra.mxu0 %v1210
    %1431 = vmatprep.subr.bf16.mxu0 %v1215
    %1432 = vmatpush1.bf16.msra.mxu0 %v1214
    %1433 = vmatprep.subr.bf16.mxu0 %v1219
    %1434 = vmatpush1.bf16.msra.mxu0 %v1218
    %1435 = vmatprep.subr.bf16.mxu0 %v1223
    %1436 = vmatpush1.bf16.msra.mxu0 %v1222
    %1437 = vmatprep.subr.bf16.mxu0 %v1227
    %1438 = vmatpush1.bf16.msra.mxu0 %v1226
    %1439 = vmatprep.subr.bf16.mxu0 %v1231
    %1440 = vmatpush1.bf16.msra.mxu0 %v1230
    %1441 = vmatprep.subr.bf16.mxu0 %v1235
    %1442 = vmatpush1.bf16.msra.mxu0 %v1234
    %1443 = vmatprep.subr.bf16.mxu0 %v1239
    %1444 = vmatpush1.bf16.msra.mxu0 %v1238
    %1445 = vmatprep.subr.bf16.mxu0 %v1243
    %1446 = vmatpush1.bf16.msra.mxu0 %v1242
    %1447 = vmatprep.mubr.bf16.mxu0 %v729
    %1448 = vmatmul.mubr.bf16.gmra.mrb[0].mxu0 %v728
    %v1449 = vpop.f32.mrb[0].mxu0
    %v1450 = vadd.f32 %v1409, %v1449
    %v1451 = vpop.f32.mrb[0].mxu0
    %v1452 = vadd.f32 %v1411, %v1451
    %v1453 = vpop.f32.mrb[0].mxu0
    %v1454 = vpop.f32.mrb[0].mxu0
    %1455 = vdwg.mxu0
    %1456 = vmatprep.subr.bf16.mxu0 %v1121
    %1457 = vmatpush1.bf16.msra.mxu0 %v1120
    %1458 = vmatprep.subr.bf16.mxu0 %v1125
    %1459 = vmatpush1.bf16.msra.mxu0 %v1124
    %1460 = vmatprep.subr.bf16.mxu0 %v1129
    %1461 = vmatpush1.bf16.msra.mxu0 %v1128
    %1462 = vmatprep.subr.bf16.mxu0 %v1133
    %1463 = vmatpush1.bf16.msra.mxu0 %v1132
    %1464 = vmatprep.subr.bf16.mxu0 %v1137
    %1465 = vmatpush1.bf16.msra.mxu0 %v1136
    %1466 = vmatprep.subr.bf16.mxu0 %v1141
    %1467 = vmatpush1.bf16.msra.mxu0 %v1140
    %1468 = vmatprep.subr.bf16.mxu0 %v1145
    %1469 = vmatpush1.bf16.msra.mxu0 %v1144
    %1470 = vmatprep.subr.bf16.mxu0 %v1149
    %1471 = vmatpush1.bf16.msra.mxu0 %v1148
    %1472 = vmatprep.subr.bf16.mxu0 %v1153
    %1473 = vmatpush1.bf16.msra.mxu0 %v1152
    %1474 = vmatprep.subr.bf16.mxu0 %v1157
    %1475 = vmatpush1.bf16.msra.mxu0 %v1156
    %1476 = vmatprep.subr.bf16.mxu0 %v1161
    %1477 = vmatpush1.bf16.msra.mxu0 %v1160
    %1478 = vmatprep.subr.bf16.mxu0 %v1165
    %1479 = vmatpush1.bf16.msra.mxu0 %v1164
    %1480 = vmatprep.subr.bf16.mxu0 %v1169
    %1481 = vmatpush1.bf16.msra.mxu0 %v1168
    %1482 = vmatprep.subr.bf16.mxu0 %v1173
    %1483 = vmatpush1.bf16.msra.mxu0 %v1172
    %1484 = vmatprep.subr.bf16.mxu0 %v1177
    %1485 = vmatpush1.bf16.msra.mxu0 %v1176
    %1486 = vmatprep.subr.bf16.mxu0 %v1181
    %1487 = vmatpush1.bf16.msra.mxu0 %v1180
    %1488 = vmatprep.mubr.bf16.mxu0 %v727
    %1489 = vmatmul.mubr.bf16.gmra.mrb[0].mxu0 %v726
    %v1490 = vpop.f32.mrb[0].mxu0
    %v1491 = vadd.f32 0.0, %v1490
    %v1492 = vpop.f32.mrb[0].mxu0
    %v1493 = vadd.f32 0.0, %v1492
    %v1494 = vpop.f32.mrb[0].mxu0
    %v1495 = vpop.f32.mrb[0].mxu0
    %1496 = vdwg.mxu0
    %1497 = vmatprep.subr.bf16.mxu0 %v1185
    %1498 = vmatpush1.bf16.msra.mxu0 %v1184
    %1499 = vmatprep.subr.bf16.mxu0 %v1189
    %1500 = vmatpush1.bf16.msra.mxu0 %v1188
    %1501 = vmatprep.subr.bf16.mxu0 %v1193
    %1502 = vmatpush1.bf16.msra.mxu0 %v1192
    %1503 = vmatprep.subr.bf16.mxu0 %v1197
    %1504 = vmatpush1.bf16.msra.mxu0 %v1196
    %1505 = vmatprep.subr.bf16.mxu0 %v1201
    %1506 = vmatpush1.bf16.msra.mxu0 %v1200
    %1507 = vmatprep.subr.bf16.mxu0 %v1205
    %1508 = vmatpush1.bf16.msra.mxu0 %v1204
    %1509 = vmatprep.subr.bf16.mxu0 %v1209
    %1510 = vmatpush1.bf16.msra.mxu0 %v1208
    %1511 = vmatprep.subr.bf16.mxu0 %v1213
    %1512 = vmatpush1.bf16.msra.mxu0 %v1212
    %1513 = vmatprep.subr.bf16.mxu0 %v1217
    %1514 = vmatpush1.bf16.msra.mxu0 %v1216
    %1515 = vmatprep.subr.bf16.mxu0 %v1221
    %1516 = vmatpush1.bf16.msra.mxu0 %v1220
    %1517 = vmatprep.subr.bf16.mxu0 %v1225
    %1518 = vmatpush1.bf16.msra.mxu0 %v1224
    %1519 = vmatprep.subr.bf16.mxu0 %v1229
    %1520 = vmatpush1.bf16.msra.mxu0 %v1228
    %1521 = vmatprep.subr.bf16.mxu0 %v1233
    %1522 = vmatpush1.bf16.msra.mxu0 %v1232
    %1523 = vmatprep.subr.bf16.mxu0 %v1237
    %1524 = vmatpush1.bf16.msra.mxu0 %v1236
    %1525 = vmatprep.subr.bf16.mxu0 %v1241
    %1526 = vmatpush1.bf16.msra.mxu0 %v1240
    %1527 = vmatprep.subr.bf16.mxu0 %v1245
    %1528 = vmatpush1.bf16.msra.mxu0 %v1244
    %1529 = vmatprep.mubr.bf16.mxu0 %v729
    %1530 = vmatmul.mubr.bf16.gmra.mrb[0].mxu0 %v728
    %v1531 = vpop.f32.mrb[0].mxu0
    %v1532 = vadd.f32 %v1491, %v1531
    %v1533 = vpop.f32.mrb[0].mxu0
    %v1534 = vadd.f32 %v1493, %v1533
    %v1535 = vpop.f32.mrb[0].mxu0
    %v1536 = vpop.f32.mrb[0].mxu0
    %1537 = vdwg.mxu0
    %v1666 = vunpack.c.l.b16 %v466
    %v1667 = vunpack.c.h.b16 %v466
    %v1668 = vunpack.c.l.b16 %v467
    %v1669 = vunpack.c.h.b16 %v467
    %v1670 = vunpack.c.l.b16 %v468
    %v1671 = vunpack.c.h.b16 %v468
    %v1672 = vunpack.c.l.b16 %v469
    %v1673 = vunpack.c.h.b16 %v469
    %v1674 = vunpack.c.l.b16 %v470
    %v1675 = vunpack.c.h.b16 %v470
    %v1676 = vunpack.c.l.b16 %v471
    %v1677 = vunpack.c.h.b16 %v471
    %v1678 = vunpack.c.l.b16 %v472
    %v1679 = vunpack.c.h.b16 %v472
    %v1680 = vunpack.c.l.b16 %v473
    %v1681 = vunpack.c.h.b16 %v473
    %v1682 = vunpack.c.l.b16 %v474
    %v1683 = vunpack.c.h.b16 %v474
    %v1684 = vunpack.c.l.b16 %v475
    %v1685 = vunpack.c.h.b16 %v475
    %v1686 = vunpack.c.l.b16 %v476
    %v1687 = vunpack.c.h.b16 %v476
    %v1688 = vunpack.c.l.b16 %v477
    %v1689 = vunpack.c.h.b16 %v477
    %v1690 = vunpack.c.l.b16 %v478
    %v1691 = vunpack.c.h.b16 %v478
    %v1692 = vunpack.c.l.b16 %v479
    %v1693 = vunpack.c.h.b16 %v479
    %v1694 = vunpack.c.l.b16 %v480
    %v1695 = vunpack.c.h.b16 %v480
    %v1696 = vunpack.c.l.b16 %v481
    %v1697 = vunpack.c.h.b16 %v481
    %v1698 = vunpack.c.l.b16 %v482
    %v1699 = vunpack.c.h.b16 %v482
    %v1700 = vunpack.c.l.b16 %v483
    %v1701 = vunpack.c.h.b16 %v483
    %v1702 = vunpack.c.l.b16 %v484
    %v1703 = vunpack.c.h.b16 %v484
    %v1704 = vunpack.c.l.b16 %v485
    %v1705 = vunpack.c.h.b16 %v485
    %v1706 = vunpack.c.l.b16 %v486
    %v1707 = vunpack.c.h.b16 %v486
    %v1708 = vunpack.c.l.b16 %v487
    %v1709 = vunpack.c.h.b16 %v487
    %v1710 = vunpack.c.l.b16 %v488
    %v1711 = vunpack.c.h.b16 %v488
    %v1712 = vunpack.c.l.b16 %v489
    %v1713 = vunpack.c.h.b16 %v489
    %v1714 = vunpack.c.l.b16 %v490
    %v1715 = vunpack.c.h.b16 %v490
    %v1716 = vunpack.c.l.b16 %v491
    %v1717 = vunpack.c.h.b16 %v491
    %v1718 = vunpack.c.l.b16 %v492
    %v1719 = vunpack.c.h.b16 %v492
    %v1720 = vunpack.c.l.b16 %v493
    %v1721 = vunpack.c.h.b16 %v493
    %v1722 = vunpack.c.l.b16 %v494
    %v1723 = vunpack.c.h.b16 %v494
    %v1724 = vunpack.c.l.b16 %v495
    %v1725 = vunpack.c.h.b16 %v495
    %v1726 = vunpack.c.l.b16 %v496
    %v1727 = vunpack.c.h.b16 %v496
    %v1728 = vunpack.c.l.b16 %v497
    %v1729 = vunpack.c.h.b16 %v497
    %v1730 = vunpack.c.l.b16 %v498
    %v1731 = vunpack.c.h.b16 %v498
    %v1732 = vunpack.c.l.b16 %v499
    %v1733 = vunpack.c.h.b16 %v499
    %v1734 = vunpack.c.l.b16 %v500
    %v1735 = vunpack.c.h.b16 %v500
    %v1736 = vunpack.c.l.b16 %v501
    %v1737 = vunpack.c.h.b16 %v501
    %v1738 = vunpack.c.l.b16 %v502
    %v1739 = vunpack.c.h.b16 %v502
    %v1740 = vunpack.c.l.b16 %v503
    %v1741 = vunpack.c.h.b16 %v503
    %v1742 = vunpack.c.l.b16 %v504
    %v1743 = vunpack.c.h.b16 %v504
    %v1744 = vunpack.c.l.b16 %v505
    %v1745 = vunpack.c.h.b16 %v505
    %v1746 = vunpack.c.l.b16 %v506
    %v1747 = vunpack.c.h.b16 %v506
    %v1748 = vunpack.c.l.b16 %v507
    %v1749 = vunpack.c.h.b16 %v507
    %v1750 = vunpack.c.l.b16 %v508
    %v1751 = vunpack.c.h.b16 %v508
    %v1752 = vunpack.c.l.b16 %v509
    %v1753 = vunpack.c.h.b16 %v509
    %v1754 = vunpack.c.l.b16 %v510
    %v1755 = vunpack.c.h.b16 %v510
    %v1756 = vunpack.c.l.b16 %v511
    %v1757 = vunpack.c.h.b16 %v511
    %v1758 = vunpack.c.l.b16 %v512
    %v1759 = vunpack.c.h.b16 %v512
    %v1760 = vunpack.c.l.b16 %v513
    %v1761 = vunpack.c.h.b16 %v513
    %v1762 = vunpack.c.l.b16 %v514
    %v1763 = vunpack.c.h.b16 %v514
    %v1764 = vunpack.c.l.b16 %v515
    %v1765 = vunpack.c.h.b16 %v515
    %v1766 = vunpack.c.l.b16 %v516
    %v1767 = vunpack.c.h.b16 %v516
    %v1768 = vunpack.c.l.b16 %v517
    %v1769 = vunpack.c.h.b16 %v517
    %v1770 = vunpack.c.l.b16 %v518
    %v1771 = vunpack.c.h.b16 %v518
    %v1772 = vunpack.c.l.b16 %v519
    %v1773 = vunpack.c.h.b16 %v519
    %v1774 = vunpack.c.l.b16 %v520
    %v1775 = vunpack.c.h.b16 %v520
    %v1776 = vunpack.c.l.b16 %v521
    %v1777 = vunpack.c.h.b16 %v521
    %v1778 = vunpack.c.l.b16 %v522
    %v1779 = vunpack.c.h.b16 %v522
    %v1780 = vunpack.c.l.b16 %v523
    %v1781 = vunpack.c.h.b16 %v523
    %v1782 = vunpack.c.l.b16 %v524
    %v1783 = vunpack.c.h.b16 %v524
    %v1784 = vunpack.c.l.b16 %v525
    %v1785 = vunpack.c.h.b16 %v525
    %v1786 = vunpack.c.l.b16 %v526
    %v1787 = vunpack.c.h.b16 %v526
    %v1788 = vunpack.c.l.b16 %v527
    %v1789 = vunpack.c.h.b16 %v527
    %v1790 = vunpack.c.l.b16 %v528
    %v1791 = vunpack.c.h.b16 %v528
    %v1792 = vunpack.c.l.b16 %v529
    %v1793 = vunpack.c.h.b16 %v529
    %v1794 = vunpack.c.l.b16 %v530
    %v1795 = vunpack.c.h.b16 %v530
    %v1796 = vunpack.c.l.b16 %v531
    %v1797 = vunpack.c.h.b16 %v531
    %v1798 = vunpack.c.l.b16 %v532
    %v1799 = vunpack.c.h.b16 %v532
    %v1800 = vunpack.c.l.b16 %v533
    %v1801 = vunpack.c.h.b16 %v533
    %v1802 = vunpack.c.l.b16 %v534
    %v1803 = vunpack.c.h.b16 %v534
    %v1804 = vunpack.c.l.b16 %v535
    %v1805 = vunpack.c.h.b16 %v535
    %v1806 = vunpack.c.l.b16 %v536
    %v1807 = vunpack.c.h.b16 %v536
    %v1808 = vunpack.c.l.b16 %v537
    %v1809 = vunpack.c.h.b16 %v537
    %v1810 = vunpack.c.l.b16 %v538
    %v1811 = vunpack.c.h.b16 %v538
    %v1812 = vunpack.c.l.b16 %v539
    %v1813 = vunpack.c.h.b16 %v539
    %v1814 = vunpack.c.l.b16 %v540
    %v1815 = vunpack.c.h.b16 %v540
    %v1816 = vunpack.c.l.b16 %v541
    %v1817 = vunpack.c.h.b16 %v541
    %v1818 = vunpack.c.l.b16 %v542
    %v1819 = vunpack.c.h.b16 %v542
    %v1820 = vunpack.c.l.b16 %v543
    %v1821 = vunpack.c.h.b16 %v543
    %v1822 = vunpack.c.l.b16 %v544
    %v1823 = vunpack.c.h.b16 %v544
    %v1824 = vunpack.c.l.b16 %v545
    %v1825 = vunpack.c.h.b16 %v545
    %v1826 = vunpack.c.l.b16 %v546
    %v1827 = vunpack.c.h.b16 %v546
    %v1828 = vunpack.c.l.b16 %v547
    %v1829 = vunpack.c.h.b16 %v547
    %v1830 = vunpack.c.l.b16 %v548
    %v1831 = vunpack.c.h.b16 %v548
    %v1832 = vunpack.c.l.b16 %v549
    %v1833 = vunpack.c.h.b16 %v549
    %v1834 = vunpack.c.l.b16 %v550
    %v1835 = vunpack.c.h.b16 %v550
    %v1836 = vunpack.c.l.b16 %v551
    %v1837 = vunpack.c.h.b16 %v551
    %v1838 = vunpack.c.l.b16 %v552
    %v1839 = vunpack.c.h.b16 %v552
    %v1840 = vunpack.c.l.b16 %v553
    %v1841 = vunpack.c.h.b16 %v553
    %v1842 = vunpack.c.l.b16 %v554
    %v1843 = vunpack.c.h.b16 %v554
    %v1844 = vunpack.c.l.b16 %v555
    %v1845 = vunpack.c.h.b16 %v555
    %v1846 = vunpack.c.l.b16 %v556
    %v1847 = vunpack.c.h.b16 %v556
    %v1848 = vunpack.c.l.b16 %v557
    %v1849 = vunpack.c.h.b16 %v557
    %v1850 = vunpack.c.l.b16 %v558
    %v1851 = vunpack.c.h.b16 %v558
    %v1852 = vunpack.c.l.b16 %v559
    %v1853 = vunpack.c.h.b16 %v559
    %v1854 = vunpack.c.l.b16 %v560
    %v1855 = vunpack.c.h.b16 %v560
    %v1856 = vunpack.c.l.b16 %v561
    %v1857 = vunpack.c.h.b16 %v561
    %v1858 = vunpack.c.l.b16 %v562
    %v1859 = vunpack.c.h.b16 %v562
    %v1860 = vunpack.c.l.b16 %v563
    %v1861 = vunpack.c.h.b16 %v563
    %v1862 = vunpack.c.l.b16 %v564
    %v1863 = vunpack.c.h.b16 %v564
    %v1864 = vunpack.c.l.b16 %v565
    %v1865 = vunpack.c.h.b16 %v565
    %v1866 = vunpack.c.l.b16 %v566
    %v1867 = vunpack.c.h.b16 %v566
    %v1868 = vunpack.c.l.b16 %v567
    %v1869 = vunpack.c.h.b16 %v567
    %v1870 = vunpack.c.l.b16 %v568
    %v1871 = vunpack.c.h.b16 %v568
    %v1872 = vunpack.c.l.b16 %v569
    %v1873 = vunpack.c.h.b16 %v569
    %v1874 = vunpack.c.l.b16 %v570
    %v1875 = vunpack.c.h.b16 %v570
    %v1876 = vunpack.c.l.b16 %v571
    %v1877 = vunpack.c.h.b16 %v571
    %v1878 = vunpack.c.l.b16 %v572
    %v1879 = vunpack.c.h.b16 %v572
    %v1880 = vunpack.c.l.b16 %v573
    %v1881 = vunpack.c.h.b16 %v573
    %v1882 = vunpack.c.l.b16 %v574
    %v1883 = vunpack.c.h.b16 %v574
    %v1884 = vunpack.c.l.b16 %v575
    %v1885 = vunpack.c.h.b16 %v575
    %v1886 = vunpack.c.l.b16 %v576
    %v1887 = vunpack.c.h.b16 %v576
    %v1888 = vunpack.c.l.b16 %v577
    %v1889 = vunpack.c.h.b16 %v577
    %v1890 = vunpack.c.l.b16 %v578
    %v1891 = vunpack.c.h.b16 %v578
    %v1892 = vunpack.c.l.b16 %v579
    %v1893 = vunpack.c.h.b16 %v579
    %v1894 = vunpack.c.l.b16 %v580
    %v1895 = vunpack.c.h.b16 %v580
    %v1896 = vunpack.c.l.b16 %v581
    %v1897 = vunpack.c.h.b16 %v581
    %v1898 = vunpack.c.l.b16 %v582
    %v1899 = vunpack.c.h.b16 %v582
    %v1900 = vunpack.c.l.b16 %v583
    %v1901 = vunpack.c.h.b16 %v583
    %v1902 = vunpack.c.l.b16 %v584
    %v1903 = vunpack.c.h.b16 %v584
    %v1904 = vunpack.c.l.b16 %v585
    %v1905 = vunpack.c.h.b16 %v585
    %v1906 = vunpack.c.l.b16 %v586
    %v1907 = vunpack.c.h.b16 %v586
    %v1908 = vunpack.c.l.b16 %v587
    %v1909 = vunpack.c.h.b16 %v587
    %v1910 = vunpack.c.l.b16 %v588
    %v1911 = vunpack.c.h.b16 %v588
    %v1912 = vunpack.c.l.b16 %v589
    %v1913 = vunpack.c.h.b16 %v589
    %v1914 = vunpack.c.l.b16 %v590
    %v1915 = vunpack.c.h.b16 %v590
    %v1916 = vunpack.c.l.b16 %v591
    %v1917 = vunpack.c.h.b16 %v591
    %v1918 = vunpack.c.l.b16 %v592
    %v1919 = vunpack.c.h.b16 %v592
    %v1920 = vunpack.c.l.b16 %v593
    %v1921 = vunpack.c.h.b16 %v593
    %v1922 = vpack.c.b16 %v1670, %v1666
    %v1923 = vpack.c.b16 %v1671, %v1667
    %v1924 = vpack.c.b16 %v1672, %v1668
    %v1925 = vpack.c.b16 %v1673, %v1669
    %v1926 = vpack.c.b16 %v1678, %v1674
    %v1927 = vpack.c.b16 %v1679, %v1675
    %v1928 = vpack.c.b16 %v1680, %v1676
    %v1929 = vpack.c.b16 %v1681, %v1677
    %v1930 = vpack.c.b16 %v1686, %v1682
    %v1931 = vpack.c.b16 %v1687, %v1683
    %v1932 = vpack.c.b16 %v1688, %v1684
    %v1933 = vpack.c.b16 %v1689, %v1685
    %v1934 = vpack.c.b16 %v1694, %v1690
    %v1935 = vpack.c.b16 %v1695, %v1691
    %v1936 = vpack.c.b16 %v1696, %v1692
    %v1937 = vpack.c.b16 %v1697, %v1693
    %v1938 = vpack.c.b16 %v1702, %v1698
    %v1939 = vpack.c.b16 %v1703, %v1699
    %v1940 = vpack.c.b16 %v1704, %v1700
    %v1941 = vpack.c.b16 %v1705, %v1701
    %v1942 = vpack.c.b16 %v1710, %v1706
    %v1943 = vpack.c.b16 %v1711, %v1707
    %v1944 = vpack.c.b16 %v1712, %v1708
    %v1945 = vpack.c.b16 %v1713, %v1709
    %v1946 = vpack.c.b16 %v1718, %v1714
    %v1947 = vpack.c.b16 %v1719, %v1715
    %v1948 = vpack.c.b16 %v1720, %v1716
    %v1949 = vpack.c.b16 %v1721, %v1717
    %v1950 = vpack.c.b16 %v1726, %v1722
    %v1951 = vpack.c.b16 %v1727, %v1723
    %v1952 = vpack.c.b16 %v1728, %v1724
    %v1953 = vpack.c.b16 %v1729, %v1725
    %v1954 = vpack.c.b16 %v1734, %v1730
    %v1955 = vpack.c.b16 %v1735, %v1731
    %v1956 = vpack.c.b16 %v1736, %v1732
    %v1957 = vpack.c.b16 %v1737, %v1733
    %v1958 = vpack.c.b16 %v1742, %v1738
    %v1959 = vpack.c.b16 %v1743, %v1739
    %v1960 = vpack.c.b16 %v1744, %v1740
    %v1961 = vpack.c.b16 %v1745, %v1741
    %v1962 = vpack.c.b16 %v1750, %v1746
    %v1963 = vpack.c.b16 %v1751, %v1747
    %v1964 = vpack.c.b16 %v1752, %v1748
    %v1965 = vpack.c.b16 %v1753, %v1749
    %v1966 = vpack.c.b16 %v1758, %v1754
    %v1967 = vpack.c.b16 %v1759, %v1755
    %v1968 = vpack.c.b16 %v1760, %v1756
    %v1969 = vpack.c.b16 %v1761, %v1757
    %v1970 = vpack.c.b16 %v1766, %v1762
    %v1971 = vpack.c.b16 %v1767, %v1763
    %v1972 = vpack.c.b16 %v1768, %v1764
    %v1973 = vpack.c.b16 %v1769, %v1765
    %v1974 = vpack.c.b16 %v1774, %v1770
    %v1975 = vpack.c.b16 %v1775, %v1771
    %v1976 = vpack.c.b16 %v1776, %v1772
    %v1977 = vpack.c.b16 %v1777, %v1773
    %v1978 = vpack.c.b16 %v1782, %v1778
    %v1979 = vpack.c.b16 %v1783, %v1779
    %v1980 = vpack.c.b16 %v1784, %v1780
    %v1981 = vpack.c.b16 %v1785, %v1781
    %v1982 = vpack.c.b16 %v1790, %v1786
    %v1983 = vpack.c.b16 %v1791, %v1787
    %v1984 = vpack.c.b16 %v1792, %v1788
    %v1985 = vpack.c.b16 %v1793, %v1789
    %v1986 = vpack.c.b16 %v1798, %v1794
    %v1987 = vpack.c.b16 %v1799, %v1795
    %v1988 = vpack.c.b16 %v1800, %v1796
    %v1989 = vpack.c.b16 %v1801, %v1797
    %v1990 = vpack.c.b16 %v1806, %v1802
    %v1991 = vpack.c.b16 %v1807, %v1803
    %v1992 = vpack.c.b16 %v1808, %v1804
    %v1993 = vpack.c.b16 %v1809, %v1805
    %v1994 = vpack.c.b16 %v1814, %v1810
    %v1995 = vpack.c.b16 %v1815, %v1811
    %v1996 = vpack.c.b16 %v1816, %v1812
    %v1997 = vpack.c.b16 %v1817, %v1813
    %v1998 = vpack.c.b16 %v1822, %v1818
    %v1999 = vpack.c.b16 %v1823, %v1819
    %v2000 = vpack.c.b16 %v1824, %v1820
    %v2001 = vpack.c.b16 %v1825, %v1821
    %v2002 = vpack.c.b16 %v1830, %v1826
    %v2003 = vpack.c.b16 %v1831, %v1827
    %v2004 = vpack.c.b16 %v1832, %v1828
    %v2005 = vpack.c.b16 %v1833, %v1829
    %v2006 = vpack.c.b16 %v1838, %v1834
    %v2007 = vpack.c.b16 %v1839, %v1835
    %v2008 = vpack.c.b16 %v1840, %v1836
    %v2009 = vpack.c.b16 %v1841, %v1837
    %v2010 = vpack.c.b16 %v1846, %v1842
    %v2011 = vpack.c.b16 %v1847, %v1843
    %v2012 = vpack.c.b16 %v1848, %v1844
    %v2013 = vpack.c.b16 %v1849, %v1845
    %v2014 = vpack.c.b16 %v1854, %v1850
    %v2015 = vpack.c.b16 %v1855, %v1851
    %v2016 = vpack.c.b16 %v1856, %v1852
    %v2017 = vpack.c.b16 %v1857, %v1853
    %v2018 = vpack.c.b16 %v1862, %v1858
    %v2019 = vpack.c.b16 %v1863, %v1859
    %v2020 = vpack.c.b16 %v1864, %v1860
    %v2021 = vpack.c.b16 %v1865, %v1861
    %v2022 = vpack.c.b16 %v1870, %v1866
    %v2023 = vpack.c.b16 %v1871, %v1867
    %v2024 = vpack.c.b16 %v1872, %v1868
    %v2025 = vpack.c.b16 %v1873, %v1869
    %v2026 = vpack.c.b16 %v1878, %v1874
    %v2027 = vpack.c.b16 %v1879, %v1875
    %v2028 = vpack.c.b16 %v1880, %v1876
    %v2029 = vpack.c.b16 %v1881, %v1877
    %v2030 = vpack.c.b16 %v1886, %v1882
    %v2031 = vpack.c.b16 %v1887, %v1883
    %v2032 = vpack.c.b16 %v1888, %v1884
    %v2033 = vpack.c.b16 %v1889, %v1885
    %v2034 = vpack.c.b16 %v1894, %v1890
    %v2035 = vpack.c.b16 %v1895, %v1891
    %v2036 = vpack.c.b16 %v1896, %v1892
    %v2037 = vpack.c.b16 %v1897, %v1893
    %v2038 = vpack.c.b16 %v1902, %v1898
    %v2039 = vpack.c.b16 %v1903, %v1899
    %v2040 = vpack.c.b16 %v1904, %v1900
    %v2041 = vpack.c.b16 %v1905, %v1901
    %v2042 = vpack.c.b16 %v1910, %v1906
    %v2043 = vpack.c.b16 %v1911, %v1907
    %v2044 = vpack.c.b16 %v1912, %v1908
    %v2045 = vpack.c.b16 %v1913, %v1909
    %v2046 = vpack.c.b16 %v1918, %v1914
    %v2047 = vpack.c.b16 %v1919, %v1915
    %v2048 = vpack.c.b16 %v1920, %v1916
    %v2049 = vpack.c.b16 %v1921, %v1917
    %2178 = vmatprep.subr.bf16.mxu0 %v1923
    %2179 = vmatpush1.bf16.msra.mxu0 %v1922
    %2180 = vmatprep.subr.bf16.mxu0 %v1927
    %2181 = vmatpush1.bf16.msra.mxu0 %v1926
    %2182 = vmatprep.subr.bf16.mxu0 %v1931
    %2183 = vmatpush1.bf16.msra.mxu0 %v1930
    %2184 = vmatprep.subr.bf16.mxu0 %v1935
    %2185 = vmatpush1.bf16.msra.mxu0 %v1934
    %2186 = vmatprep.subr.bf16.mxu0 %v1939
    %2187 = vmatpush1.bf16.msra.mxu0 %v1938
    %2188 = vmatprep.subr.bf16.mxu0 %v1943
    %2189 = vmatpush1.bf16.msra.mxu0 %v1942
    %2190 = vmatprep.subr.bf16.mxu0 %v1947
    %2191 = vmatpush1.bf16.msra.mxu0 %v1946
    %2192 = vmatprep.subr.bf16.mxu0 %v1951
    %2193 = vmatpush1.bf16.msra.mxu0 %v1950
    %2194 = vmatprep.subr.bf16.mxu0 %v1955
    %2195 = vmatpush1.bf16.msra.mxu0 %v1954
    %2196 = vmatprep.subr.bf16.mxu0 %v1959
    %2197 = vmatpush1.bf16.msra.mxu0 %v1958
    %2198 = vmatprep.subr.bf16.mxu0 %v1963
    %2199 = vmatpush1.bf16.msra.mxu0 %v1962
    %2200 = vmatprep.subr.bf16.mxu0 %v1967
    %2201 = vmatpush1.bf16.msra.mxu0 %v1966
    %2202 = vmatprep.subr.bf16.mxu0 %v1971
    %2203 = vmatpush1.bf16.msra.mxu0 %v1970
    %2204 = vmatprep.subr.bf16.mxu0 %v1975
    %2205 = vmatpush1.bf16.msra.mxu0 %v1974
    %2206 = vmatprep.subr.bf16.mxu0 %v1979
    %2207 = vmatpush1.bf16.msra.mxu0 %v1978
    %2208 = vmatprep.subr.bf16.mxu0 %v1983
    %2209 = vmatpush1.bf16.msra.mxu0 %v1982
    %2210 = vmatprep.mubr.bf16.mxu0 %v459
    %2211 = vmatmul.mubr.bf16.gmra.mrb[0].mxu0 %v458
    %v2212 = vpop.f32.mrb[0].mxu0
    %v2213 = vadd.f32 %v1450, %v2212
    %v2214 = vpop.f32.mrb[0].mxu0
    %v2215 = vadd.f32 %v1452, %v2214
    %v2216 = vpop.f32.mrb[0].mxu0
    %v2217 = vpop.f32.mrb[0].mxu0
    %2218 = vdwg.mxu0
    %2219 = vmatprep.subr.bf16.mxu0 %v1987
    %2220 = vmatpush1.bf16.msra.mxu0 %v1986
    %2221 = vmatprep.subr.bf16.mxu0 %v1991
    %2222 = vmatpush1.bf16.msra.mxu0 %v1990
    %2223 = vmatprep.subr.bf16.mxu0 %v1995
    %2224 = vmatpush1.bf16.msra.mxu0 %v1994
    %2225 = vmatprep.subr.bf16.mxu0 %v1999
    %2226 = vmatpush1.bf16.msra.mxu0 %v1998
    %2227 = vmatprep.subr.bf16.mxu0 %v2003
    %2228 = vmatpush1.bf16.msra.mxu0 %v2002
    %2229 = vmatprep.subr.bf16.mxu0 %v2007
    %2230 = vmatpush1.bf16.msra.mxu0 %v2006
    %2231 = vmatprep.subr.bf16.mxu0 %v2011
    %2232 = vmatpush1.bf16.msra.mxu0 %v2010
    %2233 = vmatprep.subr.bf16.mxu0 %v2015
    %2234 = vmatpush1.bf16.msra.mxu0 %v2014
    %2235 = vmatprep.subr.bf16.mxu0 %v2019
    %2236 = vmatpush1.bf16.msra.mxu0 %v2018
    %2237 = vmatprep.subr.bf16.mxu0 %v2023
    %2238 = vmatpush1.bf16.msra.mxu0 %v2022
    %2239 = vmatprep.subr.bf16.mxu0 %v2027
    %2240 = vmatpush1.bf16.msra.mxu0 %v2026
    %2241 = vmatprep.subr.bf16.mxu0 %v2031
    %2242 = vmatpush1.bf16.msra.mxu0 %v2030
    %2243 = vmatprep.subr.bf16.mxu0 %v2035
    %2244 = vmatpush1.bf16.msra.mxu0 %v2034
    %2245 = vmatprep.subr.bf16.mxu0 %v2039
    %2246 = vmatpush1.bf16.msra.mxu0 %v2038
    %2247 = vmatprep.subr.bf16.mxu0 %v2043
    %2248 = vmatpush1.bf16.msra.mxu0 %v2042
    %2249 = vmatprep.subr.bf16.mxu0 %v2047
    %2250 = vmatpush1.bf16.msra.mxu0 %v2046
    %2251 = vmatprep.mubr.bf16.mxu0 %v461
    %2252 = vmatmul.mubr.bf16.gmra.mrb[0].mxu0 %v460
    %v2253 = vpop.f32.mrb[0].mxu0
    %v2254 = vadd.f32 %v2213, %v2253
    %v2255 = vpop.f32.mrb[0].mxu0
    %v2256 = vadd.f32 %v2215, %v2255
    %v2257 = vpop.f32.mrb[0].mxu0
    %v2258 = vpop.f32.mrb[0].mxu0
    %2259 = vdwg.mxu0
    %2260 = vmatprep.subr.bf16.mxu0 %v1925
    %2261 = vmatpush1.bf16.msra.mxu0 %v1924
    %2262 = vmatprep.subr.bf16.mxu0 %v1929
    %2263 = vmatpush1.bf16.msra.mxu0 %v1928
    %2264 = vmatprep.subr.bf16.mxu0 %v1933
    %2265 = vmatpush1.bf16.msra.mxu0 %v1932
    %2266 = vmatprep.subr.bf16.mxu0 %v1937
    %2267 = vmatpush1.bf16.msra.mxu0 %v1936
    %2268 = vmatprep.subr.bf16.mxu0 %v1941
    %2269 = vmatpush1.bf16.msra.mxu0 %v1940
    %2270 = vmatprep.subr.bf16.mxu0 %v1945
    %2271 = vmatpush1.bf16.msra.mxu0 %v1944
    %2272 = vmatprep.subr.bf16.mxu0 %v1949
    %2273 = vmatpush1.bf16.msra.mxu0 %v1948
    %2274 = vmatprep.subr.bf16.mxu0 %v1953
    %2275 = vmatpush1.bf16.msra.mxu0 %v1952
    %2276 = vmatprep.subr.bf16.mxu0 %v1957
    %2277 = vmatpush1.bf16.msra.mxu0 %v1956
    %2278 = vmatprep.subr.bf16.mxu0 %v1961
    %2279 = vmatpush1.bf16.msra.mxu0 %v1960
    %2280 = vmatprep.subr.bf16.mxu0 %v1965
    %2281 = vmatpush1.bf16.msra.mxu0 %v1964
    %2282 = vmatprep.subr.bf16.mxu0 %v1969
    %2283 = vmatpush1.bf16.msra.mxu0 %v1968
    %2284 = vmatprep.subr.bf16.mxu0 %v1973
    %2285 = vmatpush1.bf16.msra.mxu0 %v1972
    %2286 = vmatprep.subr.bf16.mxu0 %v1977
    %2287 = vmatpush1.bf16.msra.mxu0 %v1976
    %2288 = vmatprep.subr.bf16.mxu0 %v1981
    %2289 = vmatpush1.bf16.msra.mxu0 %v1980
    %2290 = vmatprep.subr.bf16.mxu0 %v1985
    %2291 = vmatpush1.bf16.msra.mxu0 %v1984
    %2292 = vmatprep.mubr.bf16.mxu0 %v459
    %2293 = vmatmul.mubr.bf16.gmra.mrb[0].mxu0 %v458
    %v2294 = vpop.f32.mrb[0].mxu0
    %v2295 = vadd.f32 %v1532, %v2294
    %v2296 = vpop.f32.mrb[0].mxu0
    %v2297 = vadd.f32 %v1534, %v2296
    %v2298 = vpop.f32.mrb[0].mxu0
    %v2299 = vpop.f32.mrb[0].mxu0
    %2300 = vdwg.mxu0
    %2301 = vmatprep.subr.bf16.mxu0 %v1989
    %2302 = vmatpush1.bf16.msra.mxu0 %v1988
    %2303 = vmatprep.subr.bf16.mxu0 %v1993
    %2304 = vmatpush1.bf16.msra.mxu0 %v1992
    %2305 = vmatprep.subr.bf16.mxu0 %v1997
    %2306 = vmatpush1.bf16.msra.mxu0 %v1996
    %2307 = vmatprep.subr.bf16.mxu0 %v2001
    %2308 = vmatpush1.bf16.msra.mxu0 %v2000
    %2309 = vmatprep.subr.bf16.mxu0 %v2005
    %2310 = vmatpush1.bf16.msra.mxu0 %v2004
    %2311 = vmatprep.subr.bf16.mxu0 %v2009
    %2312 = vmatpush1.bf16.msra.mxu0 %v2008
    %2313 = vmatprep.subr.bf16.mxu0 %v2013
    %2314 = vmatpush1.bf16.msra.mxu0 %v2012
    %2315 = vmatprep.subr.bf16.mxu0 %v2017
    %2316 = vmatpush1.bf16.msra.mxu0 %v2016
    %2317 = vmatprep.subr.bf16.mxu0 %v2021
    %2318 = vmatpush1.bf16.msra.mxu0 %v2020
    %2319 = vmatprep.subr.bf16.mxu0 %v2025
    %2320 = vmatpush1.bf16.msra.mxu0 %v2024
    %2321 = vmatprep.subr.bf16.mxu0 %v2029
    %2322 = vmatpush1.bf16.msra.mxu0 %v2028
    %2323 = vmatprep.subr.bf16.mxu0 %v2033
    %2324 = vmatpush1.bf16.msra.mxu0 %v2032
    %2325 = vmatprep.subr.bf16.mxu0 %v2037
    %2326 = vmatpush1.bf16.msra.mxu0 %v2036
    %2327 = vmatprep.subr.bf16.mxu0 %v2041
    %2328 = vmatpush1.bf16.msra.mxu0 %v2040
    %2329 = vmatprep.subr.bf16.mxu0 %v2045
    %2330 = vmatpush1.bf16.msra.mxu0 %v2044
    %2331 = vmatprep.subr.bf16.mxu0 %v2049
    %2332 = vmatpush1.bf16.msra.mxu0 %v2048
    %2333 = vmatprep.mubr.bf16.mxu0 %v461
    %2334 = vmatmul.mubr.bf16.gmra.mrb[0].mxu0 %v460
    %v2335 = vpop.f32.mrb[0].mxu0
    %v2336 = vadd.f32 %v2295, %v2335
    %v2337 = vpop.f32.mrb[0].mxu0
    %v2338 = vadd.f32 %v2297, %v2337
    %v2339 = vpop.f32.mrb[0].mxu0
    %v2340 = vpop.f32.mrb[0].mxu0
    %2341 = vdwg.mxu0
    %v2342 = vld [vmem:[#allocation8 + $0x800] sm:$0xff]
    %v2343 = vld [vmem:[#allocation8 + $0x808] sm:$0xff]
    %v2344 = vld [vmem:[#allocation8 + $0x810] sm:$0xff]
    %v2345 = vld [vmem:[#allocation8 + $0x818] sm:$0xff]
    %v2346 = vld [vmem:[#allocation8 + $0x820] sm:$0xff]
    %v2347 = vld [vmem:[#allocation8 + $0x828] sm:$0xff]
    %v2348 = vld [vmem:[#allocation8 + $0x830] sm:$0xff]
    %v2349 = vld [vmem:[#allocation8 + $0x838] sm:$0xff]
    %v2350 = vld [vmem:[#allocation8 + $0x840] sm:$0xff]
    %v2351 = vld [vmem:[#allocation8 + $0x848] sm:$0xff]
    %v2352 = vld [vmem:[#allocation8 + $0x850] sm:$0xff]
    %v2353 = vld [vmem:[#allocation8 + $0x858] sm:$0xff]
    %v2354 = vld [vmem:[#allocation8 + $0x860] sm:$0xff]
    %v2355 = vld [vmem:[#allocation8 + $0x868] sm:$0xff]
    %v2356 = vld [vmem:[#allocation8 + $0x870] sm:$0xff]
    %v2357 = vld [vmem:[#allocation8 + $0x878] sm:$0xff]
    %v2358 = vld [vmem:[#allocation8 + $0x880] sm:$0xff]
    %v2359 = vld [vmem:[#allocation8 + $0x888] sm:$0xff]
    %v2360 = vld [vmem:[#allocation8 + $0x890] sm:$0xff]
    %v2361 = vld [vmem:[#allocation8 + $0x898] sm:$0xff]
    %v2362 = vld [vmem:[#allocation8 + $0x8a0] sm:$0xff]
    %v2363 = vld [vmem:[#allocation8 + $0x8a8] sm:$0xff]
    %v2364 = vld [vmem:[#allocation8 + $0x8b0] sm:$0xff]
    %v2365 = vld [vmem:[#allocation8 + $0x8b8] sm:$0xff]
    %v2366 = vld [vmem:[#allocation8 + $0x8c0] sm:$0xff]
    %v2367 = vld [vmem:[#allocation8 + $0x8c8] sm:$0xff]
    %v2368 = vld [vmem:[#allocation8 + $0x8d0] sm:$0xff]
    %v2369 = vld [vmem:[#allocation8 + $0x8d8] sm:$0xff]
    %v2370 = vld [vmem:[#allocation8 + $0x8e0] sm:$0xff]
    %v2371 = vld [vmem:[#allocation8 + $0x8e8] sm:$0xff]
    %v2372 = vld [vmem:[#allocation8 + $0x8f0] sm:$0xff]
    %v2373 = vld [vmem:[#allocation8 + $0x8f8] sm:$0xff]
    %v2374 = vld [vmem:[#allocation8 + $0x900] sm:$0xff]
    %v2375 = vld [vmem:[#allocation8 + $0x908] sm:$0xff]
    %v2376 = vld [vmem:[#allocation8 + $0x910] sm:$0xff]
    %v2377 = vld [vmem:[#allocation8 + $0x918] sm:$0xff]
    %v2378 = vld [vmem:[#allocation8 + $0x920] sm:$0xff]
    %v2379 = vld [vmem:[#allocation8 + $0x928] sm:$0xff]
    %v2380 = vld [vmem:[#allocation8 + $0x930] sm:$0xff]
    %v2381 = vld [vmem:[#allocation8 + $0x938] sm:$0xff]
    %v2382 = vld [vmem:[#allocation8 + $0x940] sm:$0xff]
    %v2383 = vld [vmem:[#allocation8 + $0x948] sm:$0xff]
    %v2384 = vld [vmem:[#allocation8 + $0x950] sm:$0xff]
    %v2385 = vld [vmem:[#allocation8 + $0x958] sm:$0xff]
    %v2386 = vld [vmem:[#allocation8 + $0x960] sm:$0xff]
    %v2387 = vld [vmem:[#allocation8 + $0x968] sm:$0xff]
    %v2388 = vld [vmem:[#allocation8 + $0x970] sm:$0xff]
    %v2389 = vld [vmem:[#allocation8 + $0x978] sm:$0xff]
    %v2390 = vld [vmem:[#allocation8 + $0x980] sm:$0xff]
    %v2391 = vld [vmem:[#allocation8 + $0x988] sm:$0xff]
    %v2392 = vld [vmem:[#allocation8 + $0x990] sm:$0xff]
    %v2393 = vld [vmem:[#allocation8 + $0x998] sm:$0xff]
    %v2394 = vld [vmem:[#allocation8 + $0x9a0] sm:$0xff]
    %v2395 = vld [vmem:[#allocation8 + $0x9a8] sm:$0xff]
    %v2396 = vld [vmem:[#allocation8 + $0x9b0] sm:$0xff]
    %v2397 = vld [vmem:[#allocation8 + $0x9b8] sm:$0xff]
    %v2398 = vld [vmem:[#allocation8 + $0x9c0] sm:$0xff]
    %v2399 = vld [vmem:[#allocation8 + $0x9c8] sm:$0xff]
    %v2400 = vld [vmem:[#allocation8 + $0x9d0] sm:$0xff]
    %v2401 = vld [vmem:[#allocation8 + $0x9d8] sm:$0xff]
    %v2402 = vld [vmem:[#allocation8 + $0x9e0] sm:$0xff]
    %v2403 = vld [vmem:[#allocation8 + $0x9e8] sm:$0xff]
    %v2404 = vld [vmem:[#allocation8 + $0x9f0] sm:$0xff]
    %v2405 = vld [vmem:[#allocation8 + $0x9f8] sm:$0xff]
    %v2406 = vld [vmem:[#allocation8 + $0xa00] sm:$0xff]
    %v2407 = vld [vmem:[#allocation8 + $0xa08] sm:$0xff]
    %v2408 = vld [vmem:[#allocation8 + $0xa10] sm:$0xff]
    %v2409 = vld [vmem:[#allocation8 + $0xa18] sm:$0xff]
    %v2410 = vld [vmem:[#allocation8 + $0xa20] sm:$0xff]
    %v2411 = vld [vmem:[#allocation8 + $0xa28] sm:$0xff]
    %v2412 = vld [vmem:[#allocation8 + $0xa30] sm:$0xff]
    %v2413 = vld [vmem:[#allocation8 + $0xa38] sm:$0xff]
    %v2414 = vld [vmem:[#allocation8 + $0xa40] sm:$0xff]
    %v2415 = vld [vmem:[#allocation8 + $0xa48] sm:$0xff]
    %v2416 = vld [vmem:[#allocation8 + $0xa50] sm:$0xff]
    %v2417 = vld [vmem:[#allocation8 + $0xa58] sm:$0xff]
    %v2418 = vld [vmem:[#allocation8 + $0xa60] sm:$0xff]
    %v2419 = vld [vmem:[#allocation8 + $0xa68] sm:$0xff]
    %v2420 = vld [vmem:[#allocation8 + $0xa70] sm:$0xff]
    %v2421 = vld [vmem:[#allocation8 + $0xa78] sm:$0xff]
    %v2422 = vld [vmem:[#allocation8 + $0xa80] sm:$0xff]
    %v2423 = vld [vmem:[#allocation8 + $0xa88] sm:$0xff]
    %v2424 = vld [vmem:[#allocation8 + $0xa90] sm:$0xff]
    %v2425 = vld [vmem:[#allocation8 + $0xa98] sm:$0xff]
    %v2426 = vld [vmem:[#allocation8 + $0xaa0] sm:$0xff]
    %v2427 = vld [vmem:[#allocation8 + $0xaa8] sm:$0xff]
    %v2428 = vld [vmem:[#allocation8 + $0xab0] sm:$0xff]
    %v2429 = vld [vmem:[#allocation8 + $0xab8] sm:$0xff]
    %v2430 = vld [vmem:[#allocation8 + $0xac0] sm:$0xff]
    %v2431 = vld [vmem:[#allocation8 + $0xac8] sm:$0xff]
    %v2432 = vld [vmem:[#allocation8 + $0xad0] sm:$0xff]
    %v2433 = vld [vmem:[#allocation8 + $0xad8] sm:$0xff]
    %v2434 = vld [vmem:[#allocation8 + $0xae0] sm:$0xff]
    %v2435 = vld [vmem:[#allocation8 + $0xae8] sm:$0xff]
    %v2436 = vld [vmem:[#allocation8 + $0xaf0] sm:$0xff]
    %v2437 = vld [vmem:[#allocation8 + $0xaf8] sm:$0xff]
    %v2438 = vld [vmem:[#allocation8 + $0xb00] sm:$0xff]
    %v2439 = vld [vmem:[#allocation8 + $0xb08] sm:$0xff]
    %v2440 = vld [vmem:[#allocation8 + $0xb10] sm:$0xff]
    %v2441 = vld [vmem:[#allocation8 + $0xb18] sm:$0xff]
    %v2442 = vld [vmem:[#allocation8 + $0xb20] sm:$0xff]
    %v2443 = vld [vmem:[#allocation8 + $0xb28] sm:$0xff]
    %v2444 = vld [vmem:[#allocation8 + $0xb30] sm:$0xff]
    %v2445 = vld [vmem:[#allocation8 + $0xb38] sm:$0xff]
    %v2446 = vld [vmem:[#allocation8 + $0xb40] sm:$0xff]
    %v2447 = vld [vmem:[#allocation8 + $0xb48] sm:$0xff]
    %v2448 = vld [vmem:[#allocation8 + $0xb50] sm:$0xff]
    %v2449 = vld [vmem:[#allocation8 + $0xb58] sm:$0xff]
    %v2450 = vld [vmem:[#allocation8 + $0xb60] sm:$0xff]
    %v2451 = vld [vmem:[#allocation8 + $0xb68] sm:$0xff]
    %v2452 = vld [vmem:[#allocation8 + $0xb70] sm:$0xff]
    %v2453 = vld [vmem:[#allocation8 + $0xb78] sm:$0xff]
    %v2454 = vld [vmem:[#allocation8 + $0xb80] sm:$0xff]
    %v2455 = vld [vmem:[#allocation8 + $0xb88] sm:$0xff]
    %v2456 = vld [vmem:[#allocation8 + $0xb90] sm:$0xff]
    %v2457 = vld [vmem:[#allocation8 + $0xb98] sm:$0xff]
    %v2458 = vld [vmem:[#allocation8 + $0xba0] sm:$0xff]
    %v2459 = vld [vmem:[#allocation8 + $0xba8] sm:$0xff]
    %v2460 = vld [vmem:[#allocation8 + $0xbb0] sm:$0xff]
    %v2461 = vld [vmem:[#allocation8 + $0xbb8] sm:$0xff]
    %v2462 = vld [vmem:[#allocation8 + $0xbc0] sm:$0xff]
    %v2463 = vld [vmem:[#allocation8 + $0xbc8] sm:$0xff]
    %v2464 = vld [vmem:[#allocation8 + $0xbd0] sm:$0xff]
    %v2465 = vld [vmem:[#allocation8 + $0xbd8] sm:$0xff]
    %v2466 = vld [vmem:[#allocation8 + $0xbe0] sm:$0xff]
    %v2467 = vld [vmem:[#allocation8 + $0xbe8] sm:$0xff]
    %v2468 = vld [vmem:[#allocation8 + $0xbf0] sm:$0xff]
    %v2469 = vld [vmem:[#allocation8 + $0xbf8] sm:$0xff]
    %v2598 = vunpack.c.l.b16 %v2342
    %v2599 = vunpack.c.h.b16 %v2342
    %v2600 = vunpack.c.l.b16 %v2343
    %v2601 = vunpack.c.h.b16 %v2343
    %v2602 = vunpack.c.l.b16 %v2344
    %v2603 = vunpack.c.h.b16 %v2344
    %v2604 = vunpack.c.l.b16 %v2345
    %v2605 = vunpack.c.h.b16 %v2345
    %v2606 = vunpack.c.l.b16 %v2346
    %v2607 = vunpack.c.h.b16 %v2346
    %v2608 = vunpack.c.l.b16 %v2347
    %v2609 = vunpack.c.h.b16 %v2347
    %v2610 = vunpack.c.l.b16 %v2348
    %v2611 = vunpack.c.h.b16 %v2348
    %v2612 = vunpack.c.l.b16 %v2349
    %v2613 = vunpack.c.h.b16 %v2349
    %v2614 = vunpack.c.l.b16 %v2350
    %v2615 = vunpack.c.h.b16 %v2350
    %v2616 = vunpack.c.l.b16 %v2351
    %v2617 = vunpack.c.h.b16 %v2351
    %v2618 = vunpack.c.l.b16 %v2352
    %v2619 = vunpack.c.h.b16 %v2352
    %v2620 = vunpack.c.l.b16 %v2353
    %v2621 = vunpack.c.h.b16 %v2353
    %v2622 = vunpack.c.l.b16 %v2354
    %v2623 = vunpack.c.h.b16 %v2354
    %v2624 = vunpack.c.l.b16 %v2355
    %v2625 = vunpack.c.h.b16 %v2355
    %v2626 = vunpack.c.l.b16 %v2356
    %v2627 = vunpack.c.h.b16 %v2356
    %v2628 = vunpack.c.l.b16 %v2357
    %v2629 = vunpack.c.h.b16 %v2357
    %v2630 = vunpack.c.l.b16 %v2358
    %v2631 = vunpack.c.h.b16 %v2358
    %v2632 = vunpack.c.l.b16 %v2359
    %v2633 = vunpack.c.h.b16 %v2359
    %v2634 = vunpack.c.l.b16 %v2360
    %v2635 = vunpack.c.h.b16 %v2360
    %v2636 = vunpack.c.l.b16 %v2361
    %v2637 = vunpack.c.h.b16 %v2361
    %v2638 = vunpack.c.l.b16 %v2362
    %v2639 = vunpack.c.h.b16 %v2362
    %v2640 = vunpack.c.l.b16 %v2363
    %v2641 = vunpack.c.h.b16 %v2363
    %v2642 = vunpack.c.l.b16 %v2364
    %v2643 = vunpack.c.h.b16 %v2364
    %v2644 = vunpack.c.l.b16 %v2365
    %v2645 = vunpack.c.h.b16 %v2365
    %v2646 = vunpack.c.l.b16 %v2366
    %v2647 = vunpack.c.h.b16 %v2366
    %v2648 = vunpack.c.l.b16 %v2367
    %v2649 = vunpack.c.h.b16 %v2367
    %v2650 = vunpack.c.l.b16 %v2368
    %v2651 = vunpack.c.h.b16 %v2368
    %v2652 = vunpack.c.l.b16 %v2369
    %v2653 = vunpack.c.h.b16 %v2369
    %v2654 = vunpack.c.l.b16 %v2370
    %v2655 = vunpack.c.h.b16 %v2370
    %v2656 = vunpack.c.l.b16 %v2371
    %v2657 = vunpack.c.h.b16 %v2371
    %v2658 = vunpack.c.l.b16 %v2372
    %v2659 = vunpack.c.h.b16 %v2372
    %v2660 = vunpack.c.l.b16 %v2373
    %v2661 = vunpack.c.h.b16 %v2373
    %v2662 = vunpack.c.l.b16 %v2374
    %v2663 = vunpack.c.h.b16 %v2374
    %v2664 = vunpack.c.l.b16 %v2375
    %v2665 = vunpack.c.h.b16 %v2375
    %v2666 = vunpack.c.l.b16 %v2376
    %v2667 = vunpack.c.h.b16 %v2376
    %v2668 = vunpack.c.l.b16 %v2377
    %v2669 = vunpack.c.h.b16 %v2377
    %v2670 = vunpack.c.l.b16 %v2378
    %v2671 = vunpack.c.h.b16 %v2378
    %v2672 = vunpack.c.l.b16 %v2379
    %v2673 = vunpack.c.h.b16 %v2379
    %v2674 = vunpack.c.l.b16 %v2380
    %v2675 = vunpack.c.h.b16 %v2380
    %v2676 = vunpack.c.l.b16 %v2381
    %v2677 = vunpack.c.h.b16 %v2381
    %v2678 = vunpack.c.l.b16 %v2382
    %v2679 = vunpack.c.h.b16 %v2382
    %v2680 = vunpack.c.l.b16 %v2383
    %v2681 = vunpack.c.h.b16 %v2383
    %v2682 = vunpack.c.l.b16 %v2384
    %v2683 = vunpack.c.h.b16 %v2384
    %v2684 = vunpack.c.l.b16 %v2385
    %v2685 = vunpack.c.h.b16 %v2385
    %v2686 = vunpack.c.l.b16 %v2386
    %v2687 = vunpack.c.h.b16 %v2386
    %v2688 = vunpack.c.l.b16 %v2387
    %v2689 = vunpack.c.h.b16 %v2387
    %v2690 = vunpack.c.l.b16 %v2388
    %v2691 = vunpack.c.h.b16 %v2388
    %v2692 = vunpack.c.l.b16 %v2389
    %v2693 = vunpack.c.h.b16 %v2389
    %v2694 = vunpack.c.l.b16 %v2390
    %v2695 = vunpack.c.h.b16 %v2390
    %v2696 = vunpack.c.l.b16 %v2391
    %v2697 = vunpack.c.h.b16 %v2391
    %v2698 = vunpack.c.l.b16 %v2392
    %v2699 = vunpack.c.h.b16 %v2392
    %v2700 = vunpack.c.l.b16 %v2393
    %v2701 = vunpack.c.h.b16 %v2393
    %v2702 = vunpack.c.l.b16 %v2394
    %v2703 = vunpack.c.h.b16 %v2394
    %v2704 = vunpack.c.l.b16 %v2395
    %v2705 = vunpack.c.h.b16 %v2395
    %v2706 = vunpack.c.l.b16 %v2396
    %v2707 = vunpack.c.h.b16 %v2396
    %v2708 = vunpack.c.l.b16 %v2397
    %v2709 = vunpack.c.h.b16 %v2397
    %v2710 = vunpack.c.l.b16 %v2398
    %v2711 = vunpack.c.h.b16 %v2398
    %v2712 = vunpack.c.l.b16 %v2399
    %v2713 = vunpack.c.h.b16 %v2399
    %v2714 = vunpack.c.l.b16 %v2400
    %v2715 = vunpack.c.h.b16 %v2400
    %v2716 = vunpack.c.l.b16 %v2401
    %v2717 = vunpack.c.h.b16 %v2401
    %v2718 = vunpack.c.l.b16 %v2402
    %v2719 = vunpack.c.h.b16 %v2402
    %v2720 = vunpack.c.l.b16 %v2403
    %v2721 = vunpack.c.h.b16 %v2403
    %v2722 = vunpack.c.l.b16 %v2404
    %v2723 = vunpack.c.h.b16 %v2404
    %v2724 = vunpack.c.l.b16 %v2405
    %v2725 = vunpack.c.h.b16 %v2405
    %v2726 = vunpack.c.l.b16 %v2406
    %v2727 = vunpack.c.h.b16 %v2406
    %v2728 = vunpack.c.l.b16 %v2407
    %v2729 = vunpack.c.h.b16 %v2407
    %v2730 = vunpack.c.l.b16 %v2408
    %v2731 = vunpack.c.h.b16 %v2408
    %v2732 = vunpack.c.l.b16 %v2409
    %v2733 = vunpack.c.h.b16 %v2409
    %v2734 = vunpack.c.l.b16 %v2410
    %v2735 = vunpack.c.h.b16 %v2410
    %v2736 = vunpack.c.l.b16 %v2411
    %v2737 = vunpack.c.h.b16 %v2411
    %v2738 = vunpack.c.l.b16 %v2412
    %v2739 = vunpack.c.h.b16 %v2412
    %v2740 = vunpack.c.l.b16 %v2413
    %v2741 = vunpack.c.h.b16 %v2413
    %v2742 = vunpack.c.l.b16 %v2414
    %v2743 = vunpack.c.h.b16 %v2414
    %v2744 = vunpack.c.l.b16 %v2415
    %v2745 = vunpack.c.h.b16 %v2415
    %v2746 = vunpack.c.l.b16 %v2416
    %v2747 = vunpack.c.h.b16 %v2416
    %v2748 = vunpack.c.l.b16 %v2417
    %v2749 = vunpack.c.h.b16 %v2417
    %v2750 = vunpack.c.l.b16 %v2418
    %v2751 = vunpack.c.h.b16 %v2418
    %v2752 = vunpack.c.l.b16 %v2419
    %v2753 = vunpack.c.h.b16 %v2419
    %v2754 = vunpack.c.l.b16 %v2420
    %v2755 = vunpack.c.h.b16 %v2420
    %v2756 = vunpack.c.l.b16 %v2421
    %v2757 = vunpack.c.h.b16 %v2421
    %v2758 = vunpack.c.l.b16 %v2422
    %v2759 = vunpack.c.h.b16 %v2422
    %v2760 = vunpack.c.l.b16 %v2423
    %v2761 = vunpack.c.h.b16 %v2423
    %v2762 = vunpack.c.l.b16 %v2424
    %v2763 = vunpack.c.h.b16 %v2424
    %v2764 = vunpack.c.l.b16 %v2425
    %v2765 = vunpack.c.h.b16 %v2425
    %v2766 = vunpack.c.l.b16 %v2426
    %v2767 = vunpack.c.h.b16 %v2426
    %v2768 = vunpack.c.l.b16 %v2427
    %v2769 = vunpack.c.h.b16 %v2427
    %v2770 = vunpack.c.l.b16 %v2428
    %v2771 = vunpack.c.h.b16 %v2428
    %v2772 = vunpack.c.l.b16 %v2429
    %v2773 = vunpack.c.h.b16 %v2429
    %v2774 = vunpack.c.l.b16 %v2430
    %v2775 = vunpack.c.h.b16 %v2430
    %v2776 = vunpack.c.l.b16 %v2431
    %v2777 = vunpack.c.h.b16 %v2431
    %v2778 = vunpack.c.l.b16 %v2432
    %v2779 = vunpack.c.h.b16 %v2432
    %v2780 = vunpack.c.l.b16 %v2433
    %v2781 = vunpack.c.h.b16 %v2433
    %v2782 = vunpack.c.l.b16 %v2434
    %v2783 = vunpack.c.h.b16 %v2434
    %v2784 = vunpack.c.l.b16 %v2435
    %v2785 = vunpack.c.h.b16 %v2435
    %v2786 = vunpack.c.l.b16 %v2436
    %v2787 = vunpack.c.h.b16 %v2436
    %v2788 = vunpack.c.l.b16 %v2437
    %v2789 = vunpack.c.h.b16 %v2437
    %v2790 = vunpack.c.l.b16 %v2438
    %v2791 = vunpack.c.h.b16 %v2438
    %v2792 = vunpack.c.l.b16 %v2439
    %v2793 = vunpack.c.h.b16 %v2439
    %v2794 = vunpack.c.l.b16 %v2440
    %v2795 = vunpack.c.h.b16 %v2440
    %v2796 = vunpack.c.l.b16 %v2441
    %v2797 = vunpack.c.h.b16 %v2441
    %v2798 = vunpack.c.l.b16 %v2442
    %v2799 = vunpack.c.h.b16 %v2442
    %v2800 = vunpack.c.l.b16 %v2443
    %v2801 = vunpack.c.h.b16 %v2443
    %v2802 = vunpack.c.l.b16 %v2444
    %v2803 = vunpack.c.h.b16 %v2444
    %v2804 = vunpack.c.l.b16 %v2445
    %v2805 = vunpack.c.h.b16 %v2445
    %v2806 = vunpack.c.l.b16 %v2446
    %v2807 = vunpack.c.h.b16 %v2446
    %v2808 = vunpack.c.l.b16 %v2447
    %v2809 = vunpack.c.h.b16 %v2447
    %v2810 = vunpack.c.l.b16 %v2448
    %v2811 = vunpack.c.h.b16 %v2448
    %v2812 = vunpack.c.l.b16 %v2449
    %v2813 = vunpack.c.h.b16 %v2449
    %v2814 = vunpack.c.l.b16 %v2450
    %v2815 = vunpack.c.h.b16 %v2450
    %v2816 = vunpack.c.l.b16 %v2451
    %v2817 = vunpack.c.h.b16 %v2451
    %v2818 = vunpack.c.l.b16 %v2452
    %v2819 = vunpack.c.h.b16 %v2452
    %v2820 = vunpack.c.l.b16 %v2453
    %v2821 = vunpack.c.h.b16 %v2453
    %v2822 = vunpack.c.l.b16 %v2454
    %v2823 = vunpack.c.h.b16 %v2454
    %v2824 = vunpack.c.l.b16 %v2455
    %v2825 = vunpack.c.h.b16 %v2455
    %v2826 = vunpack.c.l.b16 %v2456
    %v2827 = vunpack.c.h.b16 %v2456
    %v2828 = vunpack.c.l.b16 %v2457
    %v2829 = vunpack.c.h.b16 %v2457
    %v2830 = vunpack.c.l.b16 %v2458
    %v2831 = vunpack.c.h.b16 %v2458
    %v2832 = vunpack.c.l.b16 %v2459
    %v2833 = vunpack.c.h.b16 %v2459
    %v2834 = vunpack.c.l.b16 %v2460
    %v2835 = vunpack.c.h.b16 %v2460
    %v2836 = vunpack.c.l.b16 %v2461
    %v2837 = vunpack.c.h.b16 %v2461
    %v2838 = vunpack.c.l.b16 %v2462
    %v2839 = vunpack.c.h.b16 %v2462
    %v2840 = vunpack.c.l.b16 %v2463
    %v2841 = vunpack.c.h.b16 %v2463
    %v2842 = vunpack.c.l.b16 %v2464
    %v2843 = vunpack.c.h.b16 %v2464
    %v2844 = vunpack.c.l.b16 %v2465
    %v2845 = vunpack.c.h.b16 %v2465
    %v2846 = vunpack.c.l.b16 %v2466
    %v2847 = vunpack.c.h.b16 %v2466
    %v2848 = vunpack.c.l.b16 %v2467
    %v2849 = vunpack.c.h.b16 %v2467
    %v2850 = vunpack.c.l.b16 %v2468
    %v2851 = vunpack.c.h.b16 %v2468
    %v2852 = vunpack.c.l.b16 %v2469
    %v2853 = vunpack.c.h.b16 %v2469
    %v2854 = vpack.c.b16 %v2602, %v2598
    %v2855 = vpack.c.b16 %v2603, %v2599
    %v2856 = vpack.c.b16 %v2604, %v2600
    %v2857 = vpack.c.b16 %v2605, %v2601
    %v2858 = vpack.c.b16 %v2610, %v2606
    %v2859 = vpack.c.b16 %v2611, %v2607
    %v2860 = vpack.c.b16 %v2612, %v2608
    %v2861 = vpack.c.b16 %v2613, %v2609
    %v2862 = vpack.c.b16 %v2618, %v2614
    %v2863 = vpack.c.b16 %v2619, %v2615
    %v2864 = vpack.c.b16 %v2620, %v2616
    %v2865 = vpack.c.b16 %v2621, %v2617
    %v2866 = vpack.c.b16 %v2626, %v2622
    %v2867 = vpack.c.b16 %v2627, %v2623
    %v2868 = vpack.c.b16 %v2628, %v2624
    %v2869 = vpack.c.b16 %v2629, %v2625
    %v2870 = vpack.c.b16 %v2634, %v2630
    %v2871 = vpack.c.b16 %v2635, %v2631
    %v2872 = vpack.c.b16 %v2636, %v2632
    %v2873 = vpack.c.b16 %v2637, %v2633
    %v2874 = vpack.c.b16 %v2642, %v2638
    %v2875 = vpack.c.b16 %v2643, %v2639
    %v2876 = vpack.c.b16 %v2644, %v2640
    %v2877 = vpack.c.b16 %v2645, %v2641
    %v2878 = vpack.c.b16 %v2650, %v2646
    %v2879 = vpack.c.b16 %v2651, %v2647
    %v2880 = vpack.c.b16 %v2652, %v2648
    %v2881 = vpack.c.b16 %v2653, %v2649
    %v2882 = vpack.c.b16 %v2658, %v2654
    %v2883 = vpack.c.b16 %v2659, %v2655
    %v2884 = vpack.c.b16 %v2660, %v2656
    %v2885 = vpack.c.b16 %v2661, %v2657
    %v2886 = vpack.c.b16 %v2666, %v2662
    %v2887 = vpack.c.b16 %v2667, %v2663
    %v2888 = vpack.c.b16 %v2668, %v2664
    %v2889 = vpack.c.b16 %v2669, %v2665
    %v2890 = vpack.c.b16 %v2674, %v2670
    %v2891 = vpack.c.b16 %v2675, %v2671
    %v2892 = vpack.c.b16 %v2676, %v2672
    %v2893 = vpack.c.b16 %v2677, %v2673
    %v2894 = vpack.c.b16 %v2682, %v2678
    %v2895 = vpack.c.b16 %v2683, %v2679
    %v2896 = vpack.c.b16 %v2684, %v2680
    %v2897 = vpack.c.b16 %v2685, %v2681
    %v2898 = vpack.c.b16 %v2690, %v2686
    %v2899 = vpack.c.b16 %v2691, %v2687
    %v2900 = vpack.c.b16 %v2692, %v2688
    %v2901 = vpack.c.b16 %v2693, %v2689
    %v2902 = vpack.c.b16 %v2698, %v2694
    %v2903 = vpack.c.b16 %v2699, %v2695
    %v2904 = vpack.c.b16 %v2700, %v2696
    %v2905 = vpack.c.b16 %v2701, %v2697
    %v2906 = vpack.c.b16 %v2706, %v2702
    %v2907 = vpack.c.b16 %v2707, %v2703
    %v2908 = vpack.c.b16 %v2708, %v2704
    %v2909 = vpack.c.b16 %v2709, %v2705
    %v2910 = vpack.c.b16 %v2714, %v2710
    %v2911 = vpack.c.b16 %v2715, %v2711
    %v2912 = vpack.c.b16 %v2716, %v2712
    %v2913 = vpack.c.b16 %v2717, %v2713
    %v2914 = vpack.c.b16 %v2722, %v2718
    %v2915 = vpack.c.b16 %v2723, %v2719
    %v2916 = vpack.c.b16 %v2724, %v2720
    %v2917 = vpack.c.b16 %v2725, %v2721
    %v2918 = vpack.c.b16 %v2730, %v2726
    %v2919 = vpack.c.b16 %v2731, %v2727
    %v2920 = vpack.c.b16 %v2732, %v2728
    %v2921 = vpack.c.b16 %v2733, %v2729
    %v2922 = vpack.c.b16 %v2738, %v2734
    %v2923 = vpack.c.b16 %v2739, %v2735
    %v2924 = vpack.c.b16 %v2740, %v2736
    %v2925 = vpack.c.b16 %v2741, %v2737
    %v2926 = vpack.c.b16 %v2746, %v2742
    %v2927 = vpack.c.b16 %v2747, %v2743
    %v2928 = vpack.c.b16 %v2748, %v2744
    %v2929 = vpack.c.b16 %v2749, %v2745
    %v2930 = vpack.c.b16 %v2754, %v2750
    %v2931 = vpack.c.b16 %v2755, %v2751
    %v2932 = vpack.c.b16 %v2756, %v2752
    %v2933 = vpack.c.b16 %v2757, %v2753
    %v2934 = vpack.c.b16 %v2762, %v2758
    %v2935 = vpack.c.b16 %v2763, %v2759
    %v2936 = vpack.c.b16 %v2764, %v2760
    %v2937 = vpack.c.b16 %v2765, %v2761
    %v2938 = vpack.c.b16 %v2770, %v2766
    %v2939 = vpack.c.b16 %v2771, %v2767
    %v2940 = vpack.c.b16 %v2772, %v2768
    %v2941 = vpack.c.b16 %v2773, %v2769
    %v2942 = vpack.c.b16 %v2778, %v2774
    %v2943 = vpack.c.b16 %v2779, %v2775
    %v2944 = vpack.c.b16 %v2780, %v2776
    %v2945 = vpack.c.b16 %v2781, %v2777
    %v2946 = vpack.c.b16 %v2786, %v2782
    %v2947 = vpack.c.b16 %v2787, %v2783
    %v2948 = vpack.c.b16 %v2788, %v2784
    %v2949 = vpack.c.b16 %v2789, %v2785
    %v2950 = vpack.c.b16 %v2794, %v2790
    %v2951 = vpack.c.b16 %v2795, %v2791
    %v2952 = vpack.c.b16 %v2796, %v2792
    %v2953 = vpack.c.b16 %v2797, %v2793
    %v2954 = vpack.c.b16 %v2802, %v2798
    %v2955 = vpack.c.b16 %v2803, %v2799
    %v2956 = vpack.c.b16 %v2804, %v2800
    %v2957 = vpack.c.b16 %v2805, %v2801
    %v2958 = vpack.c.b16 %v2810, %v2806
    %v2959 = vpack.c.b16 %v2811, %v2807
    %v2960 = vpack.c.b16 %v2812, %v2808
    %v2961 = vpack.c.b16 %v2813, %v2809
    %v2962 = vpack.c.b16 %v2818, %v2814
    %v2963 = vpack.c.b16 %v2819, %v2815
    %v2964 = vpack.c.b16 %v2820, %v2816
    %v2965 = vpack.c.b16 %v2821, %v2817
    %v2966 = vpack.c.b16 %v2826, %v2822
    %v2967 = vpack.c.b16 %v2827, %v2823
    %v2968 = vpack.c.b16 %v2828, %v2824
    %v2969 = vpack.c.b16 %v2829, %v2825
    %v2970 = vpack.c.b16 %v2834, %v2830
    %v2971 = vpack.c.b16 %v2835, %v2831
    %v2972 = vpack.c.b16 %v2836, %v2832
    %v2973 = vpack.c.b16 %v2837, %v2833
    %v2974 = vpack.c.b16 %v2842, %v2838
    %v2975 = vpack.c.b16 %v2843, %v2839
    %v2976 = vpack.c.b16 %v2844, %v2840
    %v2977 = vpack.c.b16 %v2845, %v2841
    %v2978 = vpack.c.b16 %v2850, %v2846
    %v2979 = vpack.c.b16 %v2851, %v2847
    %v2980 = vpack.c.b16 %v2852, %v2848
    %v2981 = vpack.c.b16 %v2853, %v2849
    %3110 = vmatprep.subr.bf16.mxu0 %v2855
    %3111 = vmatpush1.bf16.msra.mxu0 %v2854
    %3112 = vmatprep.subr.bf16.mxu0 %v2859
    %3113 = vmatpush1.bf16.msra.mxu0 %v2858
    %3114 = vmatprep.subr.bf16.mxu0 %v2863
    %3115 = vmatpush1.bf16.msra.mxu0 %v2862
    %3116 = vmatprep.subr.bf16.mxu0 %v2867
    %3117 = vmatpush1.bf16.msra.mxu0 %v2866
    %3118 = vmatprep.subr.bf16.mxu0 %v2871
    %3119 = vmatpush1.bf16.msra.mxu0 %v2870
    %3120 = vmatprep.subr.bf16.mxu0 %v2875
    %3121 = vmatpush1.bf16.msra.mxu0 %v2874
    %3122 = vmatprep.subr.bf16.mxu0 %v2879
    %3123 = vmatpush1.bf16.msra.mxu0 %v2878
    %3124 = vmatprep.subr.bf16.mxu0 %v2883
    %3125 = vmatpush1.bf16.msra.mxu0 %v2882
    %3126 = vmatprep.subr.bf16.mxu0 %v2887
    %3127 = vmatpush1.bf16.msra.mxu0 %v2886
    %3128 = vmatprep.subr.bf16.mxu0 %v2891
    %3129 = vmatpush1.bf16.msra.mxu0 %v2890
    %3130 = vmatprep.subr.bf16.mxu0 %v2895
    %3131 = vmatpush1.bf16.msra.mxu0 %v2894
    %3132 = vmatprep.subr.bf16.mxu0 %v2899
    %3133 = vmatpush1.bf16.msra.mxu0 %v2898
    %3134 = vmatprep.subr.bf16.mxu0 %v2903
    %3135 = vmatpush1.bf16.msra.mxu0 %v2902
    %3136 = vmatprep.subr.bf16.mxu0 %v2907
    %3137 = vmatpush1.bf16.msra.mxu0 %v2906
    %3138 = vmatprep.subr.bf16.mxu0 %v2911
    %3139 = vmatpush1.bf16.msra.mxu0 %v2910
    %3140 = vmatprep.subr.bf16.mxu0 %v2915
    %3141 = vmatpush1.bf16.msra.mxu0 %v2914
    %3142 = vmatprep.mubr.bf16.mxu0 %v463
    %3143 = vmatmul.mubr.bf16.gmra.mrb[0].mxu0 %v462
    %v3144 = vpop.f32.mrb[0].mxu0
    %v3145 = vadd.f32 0.0, %v3144
    %v3146 = vpop.f32.mrb[0].mxu0
    %v3147 = vadd.f32 0.0, %v3146
    %v3148 = vpop.f32.mrb[0].mxu0
    %v3149 = vpop.f32.mrb[0].mxu0
    %3150 = vdwg.mxu0
    %3151 = vmatprep.subr.bf16.mxu0 %v2919
    %3152 = vmatpush1.bf16.msra.mxu0 %v2918
    %3153 = vmatprep.subr.bf16.mxu0 %v2923
    %3154 = vmatpush1.bf16.msra.mxu0 %v2922
    %3155 = vmatprep.subr.bf16.mxu0 %v2927
    %3156 = vmatpush1.bf16.msra.mxu0 %v2926
    %3157 = vmatprep.subr.bf16.mxu0 %v2931
    %3158 = vmatpush1.bf16.msra.mxu0 %v2930
    %3159 = vmatprep.subr.bf16.mxu0 %v2935
    %3160 = vmatpush1.bf16.msra.mxu0 %v2934
    %3161 = vmatprep.subr.bf16.mxu0 %v2939
    %3162 = vmatpush1.bf16.msra.mxu0 %v2938
    %3163 = vmatprep.subr.bf16.mxu0 %v2943
    %3164 = vmatpush1.bf16.msra.mxu0 %v2942
    %3165 = vmatprep.subr.bf16.mxu0 %v2947
    %3166 = vmatpush1.bf16.msra.mxu0 %v2946
    %3167 = vmatprep.subr.bf16.mxu0 %v2951
    %3168 = vmatpush1.bf16.msra.mxu0 %v2950
    %3169 = vmatprep.subr.bf16.mxu0 %v2955
    %3170 = vmatpush1.bf16.msra.mxu0 %v2954
    %3171 = vmatprep.subr.bf16.mxu0 %v2959
    %3172 = vmatpush1.bf16.msra.mxu0 %v2958
    %3173 = vmatprep.subr.bf16.mxu0 %v2963
    %3174 = vmatpush1.bf16.msra.mxu0 %v2962
    %3175 = vmatprep.subr.bf16.mxu0 %v2967
    %3176 = vmatpush1.bf16.msra.mxu0 %v2966
    %3177 = vmatprep.subr.bf16.mxu0 %v2971
    %3178 = vmatpush1.bf16.msra.mxu0 %v2970
    %3179 = vmatprep.subr.bf16.mxu0 %v2975
    %3180 = vmatpush1.bf16.msra.mxu0 %v2974
    %3181 = vmatprep.subr.bf16.mxu0 %v2979
    %3182 = vmatpush1.bf16.msra.mxu0 %v2978
    %3183 = vmatprep.mubr.bf16.mxu0 %v465
    %3184 = vmatmul.mubr.bf16.gmra.mrb[0].mxu0 %v464
    %v3185 = vpop.f32.mrb[0].mxu0
    %v3186 = vadd.f32 %v3145, %v3185
    %v3187 = vpop.f32.mrb[0].mxu0
    %v3188 = vadd.f32 %v3147, %v3187
    %v3189 = vpop.f32.mrb[0].mxu0
    %v3190 = vpop.f32.mrb[0].mxu0
    %3191 = vdwg.mxu0
    %3192 = vmatprep.subr.bf16.mxu0 %v2857
    %3193 = vmatpush1.bf16.msra.mxu0 %v2856
    %3194 = vmatprep.subr.bf16.mxu0 %v2861
    %3195 = vmatpush1.bf16.msra.mxu0 %v2860
    %3196 = vmatprep.subr.bf16.mxu0 %v2865
    %3197 = vmatpush1.bf16.msra.mxu0 %v2864
    %3198 = vmatprep.subr.bf16.mxu0 %v2869
    %3199 = vmatpush1.bf16.msra.mxu0 %v2868
    %3200 = vmatprep.subr.bf16.mxu0 %v2873
    %3201 = vmatpush1.bf16.msra.mxu0 %v2872
    %3202 = vmatprep.subr.bf16.mxu0 %v2877
    %3203 = vmatpush1.bf16.msra.mxu0 %v2876
    %3204 = vmatprep.subr.bf16.mxu0 %v2881
    %3205 = vmatpush1.bf16.msra.mxu0 %v2880
    %3206 = vmatprep.subr.bf16.mxu0 %v2885
    %3207 = vmatpush1.bf16.msra.mxu0 %v2884
    %3208 = vmatprep.subr.bf16.mxu0 %v2889
    %3209 = vmatpush1.bf16.msra.mxu0 %v2888
    %3210 = vmatprep.subr.bf16.mxu0 %v2893
    %3211 = vmatpush1.bf16.msra.mxu0 %v2892
    %3212 = vmatprep.subr.bf16.mxu0 %v2897
    %3213 = vmatpush1.bf16.msra.mxu0 %v2896
    %3214 = vmatprep.subr.bf16.mxu0 %v2901
    %3215 = vmatpush1.bf16.msra.mxu0 %v2900
    %3216 = vmatprep.subr.bf16.mxu0 %v2905
    %3217 = vmatpush1.bf16.msra.mxu0 %v2904
    %3218 = vmatprep.subr.bf16.mxu0 %v2909
    %3219 = vmatpush1.bf16.msra.mxu0 %v2908
    %3220 = vmatprep.subr.bf16.mxu0 %v2913
    %3221 = vmatpush1.bf16.msra.mxu0 %v2912
    %3222 = vmatprep.subr.bf16.mxu0 %v2917
    %3223 = vmatpush1.bf16.msra.mxu0 %v2916
    %3224 = vmatprep.mubr.bf16.mxu0 %v463
    %3225 = vmatmul.mubr.bf16.gmra.mrb[0].mxu0 %v462
    %v3226 = vpop.f32.mrb[0].mxu0
    %v3227 = vadd.f32 0.0, %v3226
    %v3228 = vpop.f32.mrb[0].mxu0
    %v3229 = vadd.f32 0.0, %v3228
    %v3230 = vpop.f32.mrb[0].mxu0
    %v3231 = vpop.f32.mrb[0].mxu0
    %3232 = vdwg.mxu0
    %3233 = vmatprep.subr.bf16.mxu0 %v2921
    %3234 = vmatpush1.bf16.msra.mxu0 %v2920
    %3235 = vmatprep.subr.bf16.mxu0 %v2925
    %3236 = vmatpush1.bf16.msra.mxu0 %v2924
    %3237 = vmatprep.subr.bf16.mxu0 %v2929
    %3238 = vmatpush1.bf16.msra.mxu0 %v2928
    %3239 = vmatprep.subr.bf16.mxu0 %v2933
    %3240 = vmatpush1.bf16.msra.mxu0 %v2932
    %3241 = vmatprep.subr.bf16.mxu0 %v2937
    %3242 = vmatpush1.bf16.msra.mxu0 %v2936
    %3243 = vmatprep.subr.bf16.mxu0 %v2941
    %3244 = vmatpush1.bf16.msra.mxu0 %v2940
    %3245 = vmatprep.subr.bf16.mxu0 %v2945
    %3246 = vmatpush1.bf16.msra.mxu0 %v2944
    %3247 = vmatprep.subr.bf16.mxu0 %v2949
    %3248 = vmatpush1.bf16.msra.mxu0 %v2948
    %3249 = vmatprep.subr.bf16.mxu0 %v2953
    %3250 = vmatpush1.bf16.msra.mxu0 %v2952
    %3251 = vmatprep.subr.bf16.mxu0 %v2957
    %3252 = vmatpush1.bf16.msra.mxu0 %v2956
    %3253 = vmatprep.subr.bf16.mxu0 %v2961
    %3254 = vmatpush1.bf16.msra.mxu0 %v2960
    %3255 = vmatprep.subr.bf16.mxu0 %v2965
    %3256 = vmatpush1.bf16.msra.mxu0 %v2964
    %3257 = vmatprep.subr.bf16.mxu0 %v2969
    %3258 = vmatpush1.bf16.msra.mxu0 %v2968
    %3259 = vmatprep.subr.bf16.mxu0 %v2973
    %3260 = vmatpush1.bf16.msra.mxu0 %v2972
    %3261 = vmatprep.subr.bf16.mxu0 %v2977
    %3262 = vmatpush1.bf16.msra.mxu0 %v2976
    %3263 = vmatprep.subr.bf16.mxu0 %v2981
    %3264 = vmatpush1.bf16.msra.mxu0 %v2980
    %3265 = vmatprep.mubr.bf16.mxu0 %v465
    %3266 = vmatmul.mubr.bf16.gmra.mrb[0].mxu0 %v464
    %v3267 = vpop.f32.mrb[0].mxu0
    %v3268 = vadd.f32 %v3227, %v3267
    %v3269 = vpop.f32.mrb[0].mxu0
    %v3270 = vadd.f32 %v3229, %v3269
    %v3271 = vpop.f32.mrb[0].mxu0
    %v3272 = vpop.f32.mrb[0].mxu0
    %3273 = vdwg.mxu0
    %v3274 = vadd.f32 %v2254, %v3186
    %v3275 = vadd.f32 %v2256, %v3188
    %v3276 = vadd.f32 %v2336, %v3268
    %v3277 = vadd.f32 %v2338, %v3270
    %v3278 = vld [vmem:[#allocation10] sm:$0xf]
    %v3280 = vlaneseq
    %v3281 = vshrl.u32 %v3280, 7
    %v3282 = vsub.s32 0, %v3281
    %v3283 = vrot.slane %v3278, %v3282
    %v3284 = vlaneseq
    %v3285 = vshrl.u32 %v3284, 7
    %v3286 = vsub.s32 1, %v3285
    %v3287 = vrot.slane %v3278, %v3286
    %v3288 = vlaneseq
    %v3289 = vshrl.u32 %v3288, 7
    %v3290 = vsub.s32 2, %v3289
    %v3291 = vrot.slane %v3278, %v3290
    %v3292 = vlaneseq
    %v3293 = vshrl.u32 %v3292, 7
    %v3294 = vsub.s32 3, %v3293
    %v3295 = vrot.slane %v3278, %v3294
    %v3300 = vadd.f32 %v3274, %v3283
    %v3301 = vadd.f32 %v3275, %v3287
    %v3302 = vadd.f32 %v3276, %v3291
    %v3303 = vadd.f32 %v3277, %v3295
    %v3304 = vpack.c.bf16 %v3300, %v3300
    %v3305 = vpack.c.bf16 %v3301, %v3301
    %v3306 = vpack.c.bf16 %v3302, %v3302
    %v3307 = vpack.c.bf16 %v3303, %v3303
    %v3308 = vld [vmem:[#allocation11] sm:$0xf]
    %v3309 = vld [vmem:[#allocation11 + $0x4] sm:$0xf]
    %v3310 = vld [vmem:[#allocation11 + $0x8] sm:$0xf]
    %v3311 = vld [vmem:[#allocation11 + $0xc] sm:$0xf]
    %v3312 = vld [vmem:[#allocation11 + $0x10] sm:$0xf]
    %v3313 = vld [vmem:[#allocation11 + $0x14] sm:$0xf]
    %v3314 = vld [vmem:[#allocation11 + $0x18] sm:$0xf]
    %v3315 = vld [vmem:[#allocation11 + $0x1c] sm:$0xf]
    %v3316 = vld [vmem:[#allocation11 + $0x20] sm:$0xf]
    %v3317 = vld [vmem:[#allocation11 + $0x24] sm:$0xf]
    %v3318 = vld [vmem:[#allocation11 + $0x28] sm:$0xf]
    %v3319 = vld [vmem:[#allocation11 + $0x2c] sm:$0xf]
    %v3320 = vld [vmem:[#allocation11 + $0x30] sm:$0xf]
    %v3321 = vld [vmem:[#allocation11 + $0x34] sm:$0xf]
    %v3322 = vld [vmem:[#allocation11 + $0x38] sm:$0xf]
    %v3323 = vld [vmem:[#allocation11 + $0x3c] sm:$0xf]
    %v3324 = vld [vmem:[#allocation11 + $0x40] sm:$0xf]
    %v3325 = vld [vmem:[#allocation11 + $0x44] sm:$0xf]
    %v3326 = vld [vmem:[#allocation11 + $0x48] sm:$0xf]
    %v3327 = vld [vmem:[#allocation11 + $0x4c] sm:$0xf]
    %v3328 = vld [vmem:[#allocation11 + $0x50] sm:$0xf]
    %v3329 = vld [vmem:[#allocation11 + $0x54] sm:$0xf]
    %v3330 = vld [vmem:[#allocation11 + $0x58] sm:$0xf]
    %v3331 = vld [vmem:[#allocation11 + $0x5c] sm:$0xf]
    %v3332 = vld [vmem:[#allocation11 + $0x60] sm:$0xf]
    %v3333 = vld [vmem:[#allocation11 + $0x64] sm:$0xf]
    %v3334 = vld [vmem:[#allocation11 + $0x68] sm:$0xf]
    %v3335 = vld [vmem:[#allocation11 + $0x6c] sm:$0xf]
    %v3336 = vld [vmem:[#allocation11 + $0x70] sm:$0xf]
    %v3337 = vld [vmem:[#allocation11 + $0x74] sm:$0xf]
    %v3338 = vld [vmem:[#allocation11 + $0x78] sm:$0xf]
    %v3339 = vld [vmem:[#allocation11 + $0x7c] sm:$0xf]
    %v3340 = vld [vmem:[#allocation11 + $0x80] sm:$0xf]
    %v3341 = vld [vmem:[#allocation11 + $0x84] sm:$0xf]
    %v3342 = vld [vmem:[#allocation11 + $0x88] sm:$0xf]
    %v3343 = vld [vmem:[#allocation11 + $0x8c] sm:$0xf]
    %v3344 = vld [vmem:[#allocation11 + $0x90] sm:$0xf]
    %v3345 = vld [vmem:[#allocation11 + $0x94] sm:$0xf]
    %v3346 = vld [vmem:[#allocation11 + $0x98] sm:$0xf]
    %v3347 = vld [vmem:[#allocation11 + $0x9c] sm:$0xf]
    %v3348 = vld [vmem:[#allocation11 + $0xa0] sm:$0xf]
    %v3349 = vld [vmem:[#allocation11 + $0xa4] sm:$0xf]
    %v3350 = vld [vmem:[#allocation11 + $0xa8] sm:$0xf]
    %v3351 = vld [vmem:[#allocation11 + $0xac] sm:$0xf]
    %v3352 = vld [vmem:[#allocation11 + $0xb0] sm:$0xf]
    %v3353 = vld [vmem:[#allocation11 + $0xb4] sm:$0xf]
    %v3354 = vld [vmem:[#allocation11 + $0xb8] sm:$0xf]
    %v3355 = vld [vmem:[#allocation11 + $0xbc] sm:$0xf]
    %v3356 = vld [vmem:[#allocation11 + $0xc0] sm:$0xf]
    %v3357 = vld [vmem:[#allocation11 + $0xc4] sm:$0xf]
    %v3358 = vld [vmem:[#allocation11 + $0xc8] sm:$0xf]
    %v3359 = vld [vmem:[#allocation11 + $0xcc] sm:$0xf]
    %v3360 = vld [vmem:[#allocation11 + $0xd0] sm:$0xf]
    %v3361 = vld [vmem:[#allocation11 + $0xd4] sm:$0xf]
    %v3362 = vld [vmem:[#allocation11 + $0xd8] sm:$0xf]
    %v3363 = vld [vmem:[#allocation11 + $0xdc] sm:$0xf]
    %v3364 = vld [vmem:[#allocation11 + $0xe0] sm:$0xf]
    %v3365 = vld [vmem:[#allocation11 + $0xe4] sm:$0xf]
    %v3366 = vld [vmem:[#allocation11 + $0xe8] sm:$0xf]
    %v3367 = vld [vmem:[#allocation11 + $0xec] sm:$0xf]
    %v3368 = vld [vmem:[#allocation11 + $0xf0] sm:$0xf]
    %v3369 = vld [vmem:[#allocation11 + $0xf4] sm:$0xf]
    %v3370 = vld [vmem:[#allocation11 + $0xf8] sm:$0xf]
    %v3371 = vld [vmem:[#allocation11 + $0xfc] sm:$0xf]
    %v3372 = vld [vmem:[#allocation13] sm:$0x1]
    %v3374 = vlaneseq
    %v3375 = vshrl.u32 %v3374, 7
    %v3376 = vsub.s32 0, %v3375
    %v3377 = vrot.slane %v3372, %v3376
    %v3443 = vunpack.c.l.b16 %v3308
    %v3444 = vunpack.c.l.b16 %v3309
    %v3445 = vunpack.c.l.b16 %v3310
    %v3446 = vunpack.c.l.b16 %v3311
    %v3447 = vunpack.c.l.b16 %v3312
    %v3448 = vunpack.c.l.b16 %v3313
    %v3449 = vunpack.c.l.b16 %v3314
    %v3450 = vunpack.c.l.b16 %v3315
    %v3451 = vunpack.c.l.b16 %v3316
    %v3452 = vunpack.c.l.b16 %v3317
    %v3453 = vunpack.c.l.b16 %v3318
    %v3454 = vunpack.c.l.b16 %v3319
    %v3455 = vunpack.c.l.b16 %v3320
    %v3456 = vunpack.c.l.b16 %v3321
    %v3457 = vunpack.c.l.b16 %v3322
    %v3458 = vunpack.c.l.b16 %v3323
    %v3459 = vunpack.c.l.b16 %v3324
    %v3460 = vunpack.c.l.b16 %v3325
    %v3461 = vunpack.c.l.b16 %v3326
    %v3462 = vunpack.c.l.b16 %v3327
    %v3463 = vunpack.c.l.b16 %v3328
    %v3464 = vunpack.c.l.b16 %v3329
    %v3465 = vunpack.c.l.b16 %v3330
    %v3466 = vunpack.c.l.b16 %v3331
    %v3467 = vunpack.c.l.b16 %v3332
    %v3468 = vunpack.c.l.b16 %v3333
    %v3469 = vunpack.c.l.b16 %v3334
    %v3470 = vunpack.c.l.b16 %v3335
    %v3471 = vunpack.c.l.b16 %v3336
    %v3472 = vunpack.c.l.b16 %v3337
    %v3473 = vunpack.c.l.b16 %v3338
    %v3474 = vunpack.c.l.b16 %v3339
    %v3475 = vunpack.c.l.b16 %v3340
    %v3476 = vunpack.c.l.b16 %v3341
    %v3477 = vunpack.c.l.b16 %v3342
    %v3478 = vunpack.c.l.b16 %v3343
    %v3479 = vunpack.c.l.b16 %v3344
    %v3480 = vunpack.c.l.b16 %v3345
    %v3481 = vunpack.c.l.b16 %v3346
    %v3482 = vunpack.c.l.b16 %v3347
    %v3483 = vunpack.c.l.b16 %v3348
    %v3484 = vunpack.c.l.b16 %v3349
    %v3485 = vunpack.c.l.b16 %v3350
    %v3486 = vunpack.c.l.b16 %v3351
    %v3487 = vunpack.c.l.b16 %v3352
    %v3488 = vunpack.c.l.b16 %v3353
    %v3489 = vunpack.c.l.b16 %v3354
    %v3490 = vunpack.c.l.b16 %v3355
    %v3491 = vunpack.c.l.b16 %v3356
    %v3492 = vunpack.c.l.b16 %v3357
    %v3493 = vunpack.c.l.b16 %v3358
    %v3494 = vunpack.c.l.b16 %v3359
    %v3495 = vunpack.c.l.b16 %v3360
    %v3496 = vunpack.c.l.b16 %v3361
    %v3497 = vunpack.c.l.b16 %v3362
    %v3498 = vunpack.c.l.b16 %v3363
    %v3499 = vunpack.c.l.b16 %v3364
    %v3500 = vunpack.c.l.b16 %v3365
    %v3501 = vunpack.c.l.b16 %v3366
    %v3502 = vunpack.c.l.b16 %v3367
    %v3503 = vunpack.c.l.b16 %v3368
    %v3504 = vunpack.c.l.b16 %v3369
    %v3505 = vunpack.c.l.b16 %v3370
    %v3506 = vunpack.c.l.b16 %v3371
    %v3507 = vpack.c.b16 %v3444, %v3443
    %v3508 = vpack.c.b16 %v3446, %v3445
    %v3509 = vpack.c.b16 %v3448, %v3447
    %v3510 = vpack.c.b16 %v3450, %v3449
    %v3511 = vpack.c.b16 %v3452, %v3451
    %v3512 = vpack.c.b16 %v3454, %v3453
    %v3513 = vpack.c.b16 %v3456, %v3455
    %v3514 = vpack.c.b16 %v3458, %v3457
    %v3515 = vpack.c.b16 %v3460, %v3459
    %v3516 = vpack.c.b16 %v3462, %v3461
    %v3517 = vpack.c.b16 %v3464, %v3463
    %v3518 = vpack.c.b16 %v3466, %v3465
    %v3519 = vpack.c.b16 %v3468, %v3467
    %v3520 = vpack.c.b16 %v3470, %v3469
    %v3521 = vpack.c.b16 %v3472, %v3471
    %v3522 = vpack.c.b16 %v3474, %v3473
    %v3523 = vpack.c.b16 %v3476, %v3475
    %v3524 = vpack.c.b16 %v3478, %v3477
    %v3525 = vpack.c.b16 %v3480, %v3479
    %v3526 = vpack.c.b16 %v3482, %v3481
    %v3527 = vpack.c.b16 %v3484, %v3483
    %v3528 = vpack.c.b16 %v3486, %v3485
    %v3529 = vpack.c.b16 %v3488, %v3487
    %v3530 = vpack.c.b16 %v3490, %v3489
    %v3531 = vpack.c.b16 %v3492, %v3491
    %v3532 = vpack.c.b16 %v3494, %v3493
    %v3533 = vpack.c.b16 %v3496, %v3495
    %v3534 = vpack.c.b16 %v3498, %v3497
    %v3535 = vpack.c.b16 %v3500, %v3499
    %v3536 = vpack.c.b16 %v3502, %v3501
    %v3537 = vpack.c.b16 %v3504, %v3503
    %v3538 = vpack.c.b16 %v3506, %v3505
    %3571 = vmatprep.subr.bf16.mxu0 0
    %3572 = vmatpush1.bf16.msra.mxu0 %v3507
    %3573 = vmatprep.subr.bf16.mxu0 0
    %3574 = vmatpush1.bf16.msra.mxu0 %v3508
    %3575 = vmatprep.subr.bf16.mxu0 0
    %3576 = vmatpush1.bf16.msra.mxu0 %v3509
    %3577 = vmatprep.subr.bf16.mxu0 0
    %3578 = vmatpush1.bf16.msra.mxu0 %v3510
    %3579 = vmatprep.subr.bf16.mxu0 0
    %3580 = vmatpush1.bf16.msra.mxu0 %v3511
    %3581 = vmatprep.subr.bf16.mxu0 0
    %3582 = vmatpush1.bf16.msra.mxu0 %v3512
    %3583 = vmatprep.subr.bf16.mxu0 0
    %3584 = vmatpush1.bf16.msra.mxu0 %v3513
    %3585 = vmatprep.subr.bf16.mxu0 0
    %3586 = vmatpush1.bf16.msra.mxu0 %v3514
    %3587 = vmatprep.subr.bf16.mxu0 0
    %3588 = vmatpush1.bf16.msra.mxu0 %v3515
    %3589 = vmatprep.subr.bf16.mxu0 0
    %3590 = vmatpush1.bf16.msra.mxu0 %v3516
    %3591 = vmatprep.subr.bf16.mxu0 0
    %3592 = vmatpush1.bf16.msra.mxu0 %v3517
    %3593 = vmatprep.subr.bf16.mxu0 0
    %3594 = vmatpush1.bf16.msra.mxu0 %v3518
    %3595 = vmatprep.subr.bf16.mxu0 0
    %3596 = vmatpush1.bf16.msra.mxu0 %v3519
    %3597 = vmatprep.subr.bf16.mxu0 0
    %3598 = vmatpush1.bf16.msra.mxu0 %v3520
    %3599 = vmatprep.subr.bf16.mxu0 0
    %3600 = vmatpush1.bf16.msra.mxu0 %v3521
    %3601 = vmatprep.subr.bf16.mxu0 0
    %3602 = vmatpush1.bf16.msra.mxu0 %v3522
    %3603 = vmatprep.mubr.bf16.mxu0 %v3305
    %3604 = vmatmul.mubr.bf16.gmra.mrb[0].mxu0 %v3304
    %v3605 = vpop.f32.mrb[0].mxu0
    %v3606 = vadd.f32 %v3377, %v3605
    %v3607 = vpop.f32.mrb[0].mxu0
    %v3608 = vpop.f32.mrb[0].mxu0
    %v3609 = vpop.f32.mrb[0].mxu0
    %3610 = vdwg.mxu0
    %3611 = vmatprep.subr.bf16.mxu0 0
    %3612 = vmatpush1.bf16.msra.mxu0 %v3523
    %3613 = vmatprep.subr.bf16.mxu0 0
    %3614 = vmatpush1.bf16.msra.mxu0 %v3524
    %3615 = vmatprep.subr.bf16.mxu0 0
    %3616 = vmatpush1.bf16.msra.mxu0 %v3525
    %3617 = vmatprep.subr.bf16.mxu0 0
    %3618 = vmatpush1.bf16.msra.mxu0 %v3526
    %3619 = vmatprep.subr.bf16.mxu0 0
    %3620 = vmatpush1.bf16.msra.mxu0 %v3527
    %3621 = vmatprep.subr.bf16.mxu0 0
    %3622 = vmatpush1.bf16.msra.mxu0 %v3528
    %3623 = vmatprep.subr.bf16.mxu0 0
    %3624 = vmatpush1.bf16.msra.mxu0 %v3529
    %3625 = vmatprep.subr.bf16.mxu0 0
    %3626 = vmatpush1.bf16.msra.mxu0 %v3530
    %3627 = vmatprep.subr.bf16.mxu0 0
    %3628 = vmatpush1.bf16.msra.mxu0 %v3531
    %3629 = vmatprep.subr.bf16.mxu0 0
    %3630 = vmatpush1.bf16.msra.mxu0 %v3532
    %3631 = vmatprep.subr.bf16.mxu0 0
    %3632 = vmatpush1.bf16.msra.mxu0 %v3533
    %3633 = vmatprep.subr.bf16.mxu0 0
    %3634 = vmatpush1.bf16.msra.mxu0 %v3534
    %3635 = vmatprep.subr.bf16.mxu0 0
    %3636 = vmatpush1.bf16.msra.mxu0 %v3535
    %3637 = vmatprep.subr.bf16.mxu0 0
    %3638 = vmatpush1.bf16.msra.mxu0 %v3536
    %3639 = vmatprep.subr.bf16.mxu0 0
    %3640 = vmatpush1.bf16.msra.mxu0 %v3537
    %3641 = vmatprep.subr.bf16.mxu0 0
    %3642 = vmatpush1.bf16.msra.mxu0 %v3538
    %3643 = vmatprep.mubr.bf16.mxu0 %v3307
    %3644 = vmatmul.mubr.bf16.gmra.mrb[0].mxu0 %v3306
    %v3645 = vpop.f32.mrb[0].mxu0
    %v3646 = vadd.f32 %v3606, %v3645
    %v3647 = vpop.f32.mrb[0].mxu0
    %v3648 = vpop.f32.mrb[0].mxu0
    %v3649 = vpop.f32.mrb[0].mxu0
    %3650 = vdwg.mxu0
    %3651 = vst [vmem:[#allocation14] sm:$0xff] %v3646
    // Predicated region
    $region58: #{tpu_custom_call.1} parent=1 // pred_check
      _
    $region59: #{tpu_custom_call.1} parent=1 // pred_check_branch
      %3653 = sbr.rel (0) target = $region61
    $region60: #{tpu_custom_call.1} parent=1 // pred_region
      %s3655 = ssub.s32 128, 128
      %3656 = vsyncadd [#allocation4], %s3655
      %s3658 = sshll.u32 [#allocation14], 4
      %s3659 = int_to_ptr.vmem [resolvable:$true] %s3658
      %3661 = dma.vmem_to_hbm [thread:$0]  %s3659, 128, %s7, [#allocation4]
    $region61: #{tpu_custom_call.1} parent=1 // pred_fallthru
      _
    // Predicated region
    $region62: #{tpu_custom_call.1} parent=1 // pred_check
      _
    $region63: #{tpu_custom_call.1} parent=1 // pred_check_branch
      %3663 = sbr.rel (0) target = $region65
    $region64: #{tpu_custom_call.1} parent=1 // pred_region
      %3664 = dma.done [#allocation4], 128
    $region65: #{tpu_custom_call.1} parent=1 // pred_fallthru
      _
    %3665 = vsyncpa [#allocation3], 1
    %3666 = vsyncpa [#allocation6], 1
    %3667 = vsyncpa [#allocation9], 1
    %3668 = vsyncpa [#allocation12], 1
    %3669 = vsyncpa [#allocation4], 1

</llo_original>
